<compile_context>
chip_gen: v6e
topology: v6e:2x2x1
jax: 0.10.0
libtpu: 0.0.40
codegen_flags: <defaults>
</compile_context>

<pallas_src>
import functools

import jax
import jax.numpy as jnp
from jax.experimental import pallas as pl
from jax.experimental.pallas import tpu as pltpu

KSIZES = (1, 3, 5)           # assumed op_candidates: Conv2d kxk, "same", bias
FOLD_K = max(KSIZES)         # everything folds into one 5x5 conv
PAD = FOLD_K // 2


def _round_up(x, m):
    return ((x + m - 1) // m) * m


def _choose_wpp(h, w):
    """Padded row width so that H*Wpp is a multiple of 128 (lane-dense output).

    Falls back to the minimal width (losing the lane-dense-store guarantee,
    not correctness) if no candidate <= 2*base exists.
    """
    base = w + 2 * PAD
    for wpp in range(base, base + 129):
        if (h * wpp) % 128 == 0 and wpp <= 2 * base:
            return wpp
    return base


def _choose_nb(n, lout):
    """Batch elements per grid step: aim for >= ~512 matmul lanes per step while
    keeping >= 2 grid steps (v7x dual-TC) when the batch allows it."""
    nb = max(1, min(n, 512 // max(lout, 1)))
    if n >= 2:
        nb = min(nb, max(1, n // 2))
    while n % nb:
        nb -= 1
    return nb


def _mixed_conv_kernel(w_ref, b_ref, x_ref, o_ref, xp_ref, acc_ref, *,
                       nb, cin, cin_p, h, w, pad, wpp, lout, fold_k):
    """One batch block (nb images) per grid step.

    w_ref  : VMEM (fold_k, Cout_p, fold_k*Cin_p) bf16  per-row folded weight
    b_ref  : VMEM (Cout_p, 1) f32                      folded bias
    x_ref  : VMEM (nb, Cin, H, W)                      raw input block
    o_ref  : VMEM (nb, Cout_p, Lout)                   output, Lout = H*Wpp
    xp_ref : VMEM scratch (nb, Cin_p, Lin) bf16        padded, flattened input
    acc_ref: VMEM scratch (Cout_p, nb*Lout) f32        accumulator
    """
    # ---- fused zero / channel padding into a bf16 VMEM scratch -------------
    xall = x_ref[...].astype(jnp.bfloat16)                       # (nb,cin,h,w)
    if cin_p > cin:
        xall = jnp.concatenate(
            [xall, jnp.zeros((nb, cin_p - cin, h, w), jnp.bfloat16)], axis=1)
    xp_ref[...] = jnp.zeros_like(xp_ref)
    for hh in range(h):
        off = (pad + hh) * wpp + pad
        xp_ref[:, :, off:off + w] = xall[:, :, hh, :]

    # ---- accumulating per-kernel-row MXU matmuls (no 25x im2col) -----------
    acc_ref[...] = jnp.zeros_like(acc_ref)
    xbs = [xp_ref[b] for b in range(nb)]                  # (cin_p, lin) bf16
    for kh in range(fold_k):
        cols = []
        for b in range(nb):
            taps = [xbs[b][:, kh * wpp + kw: kh * wpp + kw + lout]
                    for kw in range(fold_k)]
            cols.append(jnp.concatenate(taps, axis=0))    # (fold_k*cin_p, lout)
        rhs = cols[0] if nb == 1 else jnp.concatenate(cols, axis=1)
        acc_ref[...] += jnp.dot(w_ref[kh], rhs,           # bf16 MXU, f32 acc
                                preferred_element_type=jnp.float32)

    # ---- epilogue: f32 bias add, cast, lane-aligned per-batch stores -------
    res = acc_ref[...] + b_ref[...]                       # (cout_p, nb*lout)
    for b in range(nb):
        o_ref[b] = res[:, b * lout:(b + 1) * lout].astype(o_ref.dtype)


def mixed_conv2d(x_nchw, conv_weights, conv_biases, alpha):
    """Pallas MixedConv2D forward.  x_nchw: (N, Cin, H, W) -> (N, Cout, H, W)."""
    N, Cin, H, W = x_nchw.shape
    Cout = conv_weights[0].shape[-1]

    # ---- fold softmax(alpha) + biases into one effective 5x5 conv (exact) --
    wsm = jax.nn.softmax(alpha.astype(jnp.float32))
    w_eff = jnp.zeros((FOLD_K, FOLD_K, Cin, Cout), jnp.float32)
    b_eff = jnp.zeros((Cout,), jnp.float32)
    for i, (wgt, b) in enumerate(zip(conv_weights, conv_biases)):
        k = wgt.shape[0]
        off = PAD - k // 2
        w_eff = w_eff.at[off:off + k, off:off + k].add(
            wsm[i] * wgt.astype(jnp.float32))
        b_eff = b_eff + wsm[i] * b.reshape(-1).astype(jnp.float32)

    # ---- channel padding + per-kh bf16 weight matrices ----------------------
    cin_p = _round_up(Cin, 16)     # bf16 sublane packing
    cout_p = _round_up(Cout, 8)    # f32 accumulator / output sublanes
    w_pad = jnp.zeros((FOLD_K, FOLD_K, cin_p, cout_p), jnp.float32)
    w_pad = w_pad.at[:, :, :Cin, :Cout].set(w_eff)
    # K dim ordered (kw, cin) to match the kernel's tap concatenation
    w_kh = jnp.transpose(w_pad, (0, 3, 1, 2)).reshape(
        FOLD_K, cout_p, FOLD_K * cin_p).astype(jnp.bfloat16)
    b_col = jnp.zeros((cout_p, 1), jnp.float32).at[:Cout, 0].set(b_eff)

    # ---- layout constants ----------------------------------------------------
    wpp = _choose_wpp(H, W)              # H*wpp multiple of 128 where possible
    lout = H * wpp
    hpad = H + 2 * PAD + 1               # +1 bottom row keeps tap slices in-bounds
    lin = hpad * wpp
    nb = _choose_nb(N, lout)             # batch elements per grid step

    kernel = functools.partial(
        _mixed_conv_kernel, nb=nb, cin=Cin, cin_p=cin_p, h=H, w=W,
        pad=PAD, wpp=wpp, lout=lout, fold_k=FOLD_K)

    out_flat = pl.pallas_call(
        kernel,
        out_shape=jax.ShapeDtypeStruct((N, cout_p, lout), x_nchw.dtype),
        grid=(N // nb,),
        in_specs=[
            pl.BlockSpec((FOLD_K, cout_p, FOLD_K * cin_p), lambda i: (0, 0, 0)),
            pl.BlockSpec((cout_p, 1), lambda i: (0, 0)),
            pl.BlockSpec((nb, Cin, H, W), lambda i: (i, 0, 0, 0)),
        ],
        out_specs=pl.BlockSpec((nb, cout_p, lout), lambda i: (i, 0, 0)),
        scratch_shapes=[
            pltpu.VMEM((nb, cin_p, lin), jnp.bfloat16),     # padded input
            pltpu.VMEM((cout_p, nb * lout), jnp.float32),   # accumulator
        ],
        compiler_params=pltpu.CompilerParams(
            dimension_semantics=("parallel",),   # batch -> megacore / dual TC
            vmem_limit_bytes=32 * 1024 * 1024,
        ),
    )(w_kh, b_col, x_nchw)

    # (N, Cout_p, H*wpp) -> (N, Cout, H, W): drop padded channels/columns.
    return out_flat.reshape(N, cout_p, H, wpp)[:, :Cout, :, :W]


def mixed_conv2d_ref(x_nchw, conv_weights, conv_biases, alpha):
    """Pure-JAX reference (mirrors the PyTorch forward)."""
    x = jnp.transpose(x_nchw, (0, 2, 3, 1))
    wsm = jax.nn.softmax(alpha.astype(jnp.float32))
    out = 0.0
    for i, (w, b) in enumerate(zip(conv_weights, conv_biases)):
        pad = w.shape[0] // 2
        y = jax.lax.conv_general_dilated(
            x, w, window_strides=(1, 1),
            padding=((pad, pad), (pad, pad)),
            dimension_numbers=("NHWC", "HWIO", "NHWC"),
            precision=jax.lax.Precision.HIGHEST,
        ) + b.reshape(1, 1, 1, -1)
        out = out + wsm[i] * y
    return jnp.transpose(out, (0, 3, 1, 2))


if __name__ == "__main__":
    # Small shapes consistent with the module: N=2, Cin=4, Cout=4, H=W=16.
    N, Cin, Cout, H, W = 2, 4, 4, 16, 16

    key = jax.random.PRNGKey(0)
    kx, *kws = jax.random.split(key, 1 + 2 * len(KSIZES))

    x = jax.random.normal(kx, (N, Cin, H, W), dtype=jnp.float32)

    conv_weights, conv_biases = [], []
    for i, k in enumerate(KSIZES):
        fan_in = Cin * k * k
        w = jax.random.normal(kws[2 * i], (k, k, Cin, Cout), jnp.float32) / jnp.sqrt(fan_in)
        b = 0.01 * jax.random.normal(kws[2 * i + 1], (1, Cout), jnp.float32)
        conv_weights.append(w)
        conv_biases.append(b)

    # alpha initialized to zeros, exactly as in MixedConv2D.__init__
    alpha = jnp.zeros((len(KSIZES),), jnp.float32)

    out = jax.block_until_ready(mixed_conv2d(x, conv_weights, conv_biases, alpha))
    ref = jax.block_until_ready(mixed_conv2d_ref(x, conv_weights, conv_biases, alpha))

    assert out.shape == (N, Cout, H, W)
    # bf16 MXU operands with f32 accumulation -> slightly looser tolerance.
    assert jnp.allclose(out, ref, rtol=2e-2, atol=2e-2), "mismatch vs. JAX reference"
    print("KERNEL_OK")
</pallas_src>

<mosaic_0001>
module attributes {stable_mosaic.version = 11 : i64} {
  func.func @_mixed_conv_kernel(%arg0: i32, %arg1: memref<5x8x80xbf16, #tpu.memory_space<vmem>>, %arg2: memref<8x1xf32, #tpu.memory_space<vmem>>, %arg3: memref<1x4x16x16xf32, #tpu.memory_space<vmem>>, %arg4: memref<1x8x384xf32, #tpu.memory_space<vmem>>, %arg5: memref<1x16x504xbf16, #tpu.memory_space<vmem>>, %arg6: memref<8x384xf32, #tpu.memory_space<vmem>>) attributes {dimension_semantics = [#tpu.dimension_semantics<parallel>], iteration_bounds = array<i64: 2>, scalar_prefetch = 0 : i64, scratch_operands = 2 : i64, tpu.core_type = #tpu.core_type<tc>, window_params = [{pipeline_mode = #tpu.pipeline_mode<synchronous>, transform_indices = @transform_0, window_bounds = array<i64: 5, 8, 80>}, {pipeline_mode = #tpu.pipeline_mode<synchronous>, transform_indices = @transform_1, window_bounds = array<i64: 8, 1>}, {transform_indices = @transform_2, window_bounds = array<i64: 1, 4, 16, 16>}, {transform_indices = @transform_3, window_bounds = array<i64: 1, 8, 384>}]} {
    %c0 = arith.constant 0 : index
    %c0_0 = arith.constant 0 : index
    %c0_1 = arith.constant 0 : index
    %c0_2 = arith.constant 0 : index
    %0 = vector.load %arg3[%c0, %c0_0, %c0_1, %c0_2] : memref<1x4x16x16xf32, #tpu.memory_space<vmem>>, vector<1x4x16x16xf32>
    %1 = arith.truncf %0 : vector<1x4x16x16xf32> to vector<1x4x16x16xbf16>
    %cst = arith.constant 0.000000e+00 : bf16
    %2 = vector.broadcast %cst : bf16 to vector<1x12x16x16xbf16>
    %3 = tpu.concatenate %1, %2 in 1 : vector<1x4x16x16xbf16>, vector<1x12x16x16xbf16> -> vector<1x16x16x16xbf16>
    %cst_3 = arith.constant 0.000000e+00 : bf16
    %4 = vector.broadcast %cst_3 : bf16 to vector<1x16x504xbf16>
    %c0_4 = arith.constant 0 : index
    %c0_5 = arith.constant 0 : index
    %c0_6 = arith.constant 0 : index
    %5 = vector.load %arg5[%c0_4, %c0_5, %c0_6] : memref<1x16x504xbf16, #tpu.memory_space<vmem>>, vector<1x16x504xbf16>
    tpu.vector_store %arg5[%c0_4, %c0_5, %c0_6], %4 {strides = array<i32>} : memref<1x16x504xbf16, #tpu.memory_space<vmem>>, vector<1x16x504xbf16>,
    %6 = vector.extract_strided_slice %3 {offsets = [0, 0, 0, 0], sizes = [1, 16, 1, 16], strides = [1, 1, 1, 1]} : vector<1x16x16x16xbf16> to vector<1x16x1x16xbf16>
    %7 = vector.shape_cast %6 : vector<1x16x1x16xbf16> to vector<1x16x16xbf16>
    %c0_7 = arith.constant 0 : index
    %c0_8 = arith.constant 0 : index
    %c50 = arith.constant 50 : index
    %8 = vector.load %arg5[%c0_7, %c0_8, %c50] : memref<1x16x504xbf16, #tpu.memory_space<vmem>>, vector<1x16x16xbf16>
    tpu.vector_store %arg5[%c0_7, %c0_8, %c50], %7 {strides = array<i32>} : memref<1x16x504xbf16, #tpu.memory_space<vmem>>, vector<1x16x16xbf16>,
    %9 = vector.extract_strided_slice %3 {offsets = [0, 0, 1, 0], sizes = [1, 16, 1, 16], strides = [1, 1, 1, 1]} : vector<1x16x16x16xbf16> to vector<1x16x1x16xbf16>
    %10 = vector.shape_cast %9 : vector<1x16x1x16xbf16> to vector<1x16x16xbf16>
    %c0_9 = arith.constant 0 : index
    %c0_10 = arith.constant 0 : index
    %c74 = arith.constant 74 : index
    %11 = vector.load %arg5[%c0_9, %c0_10, %c74] : memref<1x16x504xbf16, #tpu.memory_space<vmem>>, vector<1x16x16xbf16>
    tpu.vector_store %arg5[%c0_9, %c0_10, %c74], %10 {strides = array<i32>} : memref<1x16x504xbf16, #tpu.memory_space<vmem>>, vector<1x16x16xbf16>,
    %12 = vector.extract_strided_slice %3 {offsets = [0, 0, 2, 0], sizes = [1, 16, 1, 16], strides = [1, 1, 1, 1]} : vector<1x16x16x16xbf16> to vector<1x16x1x16xbf16>
    %13 = vector.shape_cast %12 : vector<1x16x1x16xbf16> to vector<1x16x16xbf16>
    %c0_11 = arith.constant 0 : index
    %c0_12 = arith.constant 0 : index
    %c98 = arith.constant 98 : index
    %14 = vector.load %arg5[%c0_11, %c0_12, %c98] : memref<1x16x504xbf16, #tpu.memory_space<vmem>>, vector<1x16x16xbf16>
    tpu.vector_store %arg5[%c0_11, %c0_12, %c98], %13 {strides = array<i32>} : memref<1x16x504xbf16, #tpu.memory_space<vmem>>, vector<1x16x16xbf16>,
    %15 = vector.extract_strided_slice %3 {offsets = [0, 0, 3, 0], sizes = [1, 16, 1, 16], strides = [1, 1, 1, 1]} : vector<1x16x16x16xbf16> to vector<1x16x1x16xbf16>
    %16 = vector.shape_cast %15 : vector<1x16x1x16xbf16> to vector<1x16x16xbf16>
    %c0_13 = arith.constant 0 : index
    %c0_14 = arith.constant 0 : index
    %c122 = arith.constant 122 : index
    %17 = vector.load %arg5[%c0_13, %c0_14, %c122] : memref<1x16x504xbf16, #tpu.memory_space<vmem>>, vector<1x16x16xbf16>
    tpu.vector_store %arg5[%c0_13, %c0_14, %c122], %16 {strides = array<i32>} : memref<1x16x504xbf16, #tpu.memory_space<vmem>>, vector<1x16x16xbf16>,
    %18 = vector.extract_strided_slice %3 {offsets = [0, 0, 4, 0], sizes = [1, 16, 1, 16], strides = [1, 1, 1, 1]} : vector<1x16x16x16xbf16> to vector<1x16x1x16xbf16>
    %19 = vector.shape_cast %18 : vector<1x16x1x16xbf16> to vector<1x16x16xbf16>
    %c0_15 = arith.constant 0 : index
    %c0_16 = arith.constant 0 : index
    %c146 = arith.constant 146 : index
    %20 = vector.load %arg5[%c0_15, %c0_16, %c146] : memref<1x16x504xbf16, #tpu.memory_space<vmem>>, vector<1x16x16xbf16>
    tpu.vector_store %arg5[%c0_15, %c0_16, %c146], %19 {strides = array<i32>} : memref<1x16x504xbf16, #tpu.memory_space<vmem>>, vector<1x16x16xbf16>,
    %21 = vector.extract_strided_slice %3 {offsets = [0, 0, 5, 0], sizes = [1, 16, 1, 16], strides = [1, 1, 1, 1]} : vector<1x16x16x16xbf16> to vector<1x16x1x16xbf16>
    %22 = vector.shape_cast %21 : vector<1x16x1x16xbf16> to vector<1x16x16xbf16>
    %c0_17 = arith.constant 0 : index
    %c0_18 = arith.constant 0 : index
    %c170 = arith.constant 170 : index
    %23 = vector.load %arg5[%c0_17, %c0_18, %c170] : memref<1x16x504xbf16, #tpu.memory_space<vmem>>, vector<1x16x16xbf16>
    tpu.vector_store %arg5[%c0_17, %c0_18, %c170], %22 {strides = array<i32>} : memref<1x16x504xbf16, #tpu.memory_space<vmem>>, vector<1x16x16xbf16>,
    %24 = vector.extract_strided_slice %3 {offsets = [0, 0, 6, 0], sizes = [1, 16, 1, 16], strides = [1, 1, 1, 1]} : vector<1x16x16x16xbf16> to vector<1x16x1x16xbf16>
    %25 = vector.shape_cast %24 : vector<1x16x1x16xbf16> to vector<1x16x16xbf16>
    %c0_19 = arith.constant 0 : index
    %c0_20 = arith.constant 0 : index
    %c194 = arith.constant 194 : index
    %26 = vector.load %arg5[%c0_19, %c0_20, %c194] : memref<1x16x504xbf16, #tpu.memory_space<vmem>>, vector<1x16x16xbf16>
    tpu.vector_store %arg5[%c0_19, %c0_20, %c194], %25 {strides = array<i32>} : memref<1x16x504xbf16, #tpu.memory_space<vmem>>, vector<1x16x16xbf16>,
    %27 = vector.extract_strided_slice %3 {offsets = [0, 0, 7, 0], sizes = [1, 16, 1, 16], strides = [1, 1, 1, 1]} : vector<1x16x16x16xbf16> to vector<1x16x1x16xbf16>
    %28 = vector.shape_cast %27 : vector<1x16x1x16xbf16> to vector<1x16x16xbf16>
    %c0_21 = arith.constant 0 : index
    %c0_22 = arith.constant 0 : index
    %c218 = arith.constant 218 : index
    %29 = vector.load %arg5[%c0_21, %c0_22, %c218] : memref<1x16x504xbf16, #tpu.memory_space<vmem>>, vector<1x16x16xbf16>
    tpu.vector_store %arg5[%c0_21, %c0_22, %c218], %28 {strides = array<i32>} : memref<1x16x504xbf16, #tpu.memory_space<vmem>>, vector<1x16x16xbf16>,
    %30 = vector.extract_strided_slice %3 {offsets = [0, 0, 8, 0], sizes = [1, 16, 1, 16], strides = [1, 1, 1, 1]} : vector<1x16x16x16xbf16> to vector<1x16x1x16xbf16>
    %31 = vector.shape_cast %30 : vector<1x16x1x16xbf16> to vector<1x16x16xbf16>
    %c0_23 = arith.constant 0 : index
    %c0_24 = arith.constant 0 : index
    %c242 = arith.constant 242 : index
    %32 = vector.load %arg5[%c0_23, %c0_24, %c242] : memref<1x16x504xbf16, #tpu.memory_space<vmem>>, vector<1x16x16xbf16>
    tpu.vector_store %arg5[%c0_23, %c0_24, %c242], %31 {strides = array<i32>} : memref<1x16x504xbf16, #tpu.memory_space<vmem>>, vector<1x16x16xbf16>,
    %33 = vector.extract_strided_slice %3 {offsets = [0, 0, 9, 0], sizes = [1, 16, 1, 16], strides = [1, 1, 1, 1]} : vector<1x16x16x16xbf16> to vector<1x16x1x16xbf16>
    %34 = vector.shape_cast %33 : vector<1x16x1x16xbf16> to vector<1x16x16xbf16>
    %c0_25 = arith.constant 0 : index
    %c0_26 = arith.constant 0 : index
    %c266 = arith.constant 266 : index
    %35 = vector.load %arg5[%c0_25, %c0_26, %c266] : memref<1x16x504xbf16, #tpu.memory_space<vmem>>, vector<1x16x16xbf16>
    tpu.vector_store %arg5[%c0_25, %c0_26, %c266], %34 {strides = array<i32>} : memref<1x16x504xbf16, #tpu.memory_space<vmem>>, vector<1x16x16xbf16>,
    %36 = vector.extract_strided_slice %3 {offsets = [0, 0, 10, 0], sizes = [1, 16, 1, 16], strides = [1, 1, 1, 1]} : vector<1x16x16x16xbf16> to vector<1x16x1x16xbf16>
    %37 = vector.shape_cast %36 : vector<1x16x1x16xbf16> to vector<1x16x16xbf16>
    %c0_27 = arith.constant 0 : index
    %c0_28 = arith.constant 0 : index
    %c290 = arith.constant 290 : index
    %38 = vector.load %arg5[%c0_27, %c0_28, %c290] : memref<1x16x504xbf16, #tpu.memory_space<vmem>>, vector<1x16x16xbf16>
    tpu.vector_store %arg5[%c0_27, %c0_28, %c290], %37 {strides = array<i32>} : memref<1x16x504xbf16, #tpu.memory_space<vmem>>, vector<1x16x16xbf16>,
    %39 = vector.extract_strided_slice %3 {offsets = [0, 0, 11, 0], sizes = [1, 16, 1, 16], strides = [1, 1, 1, 1]} : vector<1x16x16x16xbf16> to vector<1x16x1x16xbf16>
    %40 = vector.shape_cast %39 : vector<1x16x1x16xbf16> to vector<1x16x16xbf16>
    %c0_29 = arith.constant 0 : index
    %c0_30 = arith.constant 0 : index
    %c314 = arith.constant 314 : index
    %41 = vector.load %arg5[%c0_29, %c0_30, %c314] : memref<1x16x504xbf16, #tpu.memory_space<vmem>>, vector<1x16x16xbf16>
    tpu.vector_store %arg5[%c0_29, %c0_30, %c314], %40 {strides = array<i32>} : memref<1x16x504xbf16, #tpu.memory_space<vmem>>, vector<1x16x16xbf16>,
    %42 = vector.extract_strided_slice %3 {offsets = [0, 0, 12, 0], sizes = [1, 16, 1, 16], strides = [1, 1, 1, 1]} : vector<1x16x16x16xbf16> to vector<1x16x1x16xbf16>
    %43 = vector.shape_cast %42 : vector<1x16x1x16xbf16> to vector<1x16x16xbf16>
    %c0_31 = arith.constant 0 : index
    %c0_32 = arith.constant 0 : index
    %c338 = arith.constant 338 : index
    %44 = vector.load %arg5[%c0_31, %c0_32, %c338] : memref<1x16x504xbf16, #tpu.memory_space<vmem>>, vector<1x16x16xbf16>
    tpu.vector_store %arg5[%c0_31, %c0_32, %c338], %43 {strides = array<i32>} : memref<1x16x504xbf16, #tpu.memory_space<vmem>>, vector<1x16x16xbf16>,
    %45 = vector.extract_strided_slice %3 {offsets = [0, 0, 13, 0], sizes = [1, 16, 1, 16], strides = [1, 1, 1, 1]} : vector<1x16x16x16xbf16> to vector<1x16x1x16xbf16>
    %46 = vector.shape_cast %45 : vector<1x16x1x16xbf16> to vector<1x16x16xbf16>
    %c0_33 = arith.constant 0 : index
    %c0_34 = arith.constant 0 : index
    %c362 = arith.constant 362 : index
    %47 = vector.load %arg5[%c0_33, %c0_34, %c362] : memref<1x16x504xbf16, #tpu.memory_space<vmem>>, vector<1x16x16xbf16>
    tpu.vector_store %arg5[%c0_33, %c0_34, %c362], %46 {strides = array<i32>} : memref<1x16x504xbf16, #tpu.memory_space<vmem>>, vector<1x16x16xbf16>,
    %48 = vector.extract_strided_slice %3 {offsets = [0, 0, 14, 0], sizes = [1, 16, 1, 16], strides = [1, 1, 1, 1]} : vector<1x16x16x16xbf16> to vector<1x16x1x16xbf16>
    %49 = vector.shape_cast %48 : vector<1x16x1x16xbf16> to vector<1x16x16xbf16>
    %c0_35 = arith.constant 0 : index
    %c0_36 = arith.constant 0 : index
    %c386 = arith.constant 386 : index
    %50 = vector.load %arg5[%c0_35, %c0_36, %c386] : memref<1x16x504xbf16, #tpu.memory_space<vmem>>, vector<1x16x16xbf16>
    tpu.vector_store %arg5[%c0_35, %c0_36, %c386], %49 {strides = array<i32>} : memref<1x16x504xbf16, #tpu.memory_space<vmem>>, vector<1x16x16xbf16>,
    %51 = vector.extract_strided_slice %3 {offsets = [0, 0, 15, 0], sizes = [1, 16, 1, 16], strides = [1, 1, 1, 1]} : vector<1x16x16x16xbf16> to vector<1x16x1x16xbf16>
    %52 = vector.shape_cast %51 : vector<1x16x1x16xbf16> to vector<1x16x16xbf16>
    %c0_37 = arith.constant 0 : index
    %c0_38 = arith.constant 0 : index
    %c410 = arith.constant 410 : index
    %53 = vector.load %arg5[%c0_37, %c0_38, %c410] : memref<1x16x504xbf16, #tpu.memory_space<vmem>>, vector<1x16x16xbf16>
    tpu.vector_store %arg5[%c0_37, %c0_38, %c410], %52 {strides = array<i32>} : memref<1x16x504xbf16, #tpu.memory_space<vmem>>, vector<1x16x16xbf16>,
    %cst_39 = arith.constant 0.000000e+00 : f32
    %54 = vector.broadcast %cst_39 : f32 to vector<8x384xf32>
    %c0_40 = arith.constant 0 : index
    %c0_41 = arith.constant 0 : index
    %55 = vector.load %arg6[%c0_40, %c0_41] : memref<8x384xf32, #tpu.memory_space<vmem>>, vector<8x384xf32>
    tpu.vector_store %arg6[%c0_40, %c0_41], %54 {strides = array<i32>} : memref<8x384xf32, #tpu.memory_space<vmem>>, vector<8x384xf32>,
    %c0_42 = arith.constant 0 : index
    %c0_43 = arith.constant 0 : index
    %c0_44 = arith.constant 0 : index
    %56 = vector.load %arg5[%c0_42, %c0_43, %c0_44] : memref<1x16x504xbf16, #tpu.memory_space<vmem>>, vector<1x16x504xbf16>
    %57 = vector.shape_cast %56 : vector<1x16x504xbf16> to vector<16x504xbf16>
    %58 = vector.extract_strided_slice %57 {offsets = [0, 0], sizes = [16, 384], strides = [1, 1]} : vector<16x504xbf16> to vector<16x384xbf16>
    %59 = vector.extract_strided_slice %57 {offsets = [0, 1], sizes = [16, 384], strides = [1, 1]} : vector<16x504xbf16> to vector<16x384xbf16>
    %60 = vector.extract_strided_slice %57 {offsets = [0, 2], sizes = [16, 384], strides = [1, 1]} : vector<16x504xbf16> to vector<16x384xbf16>
    %61 = vector.extract_strided_slice %57 {offsets = [0, 3], sizes = [16, 384], strides = [1, 1]} : vector<16x504xbf16> to vector<16x384xbf16>
    %62 = vector.extract_strided_slice %57 {offsets = [0, 4], sizes = [16, 384], strides = [1, 1]} : vector<16x504xbf16> to vector<16x384xbf16>
    %63 = tpu.concatenate %58, %59, %60, %61, %62 in 0 : vector<16x384xbf16>, vector<16x384xbf16>, vector<16x384xbf16>, vector<16x384xbf16>, vector<16x384xbf16> -> vector<80x384xbf16>
    %c0_45 = arith.constant 0 : index
    %c0_46 = arith.constant 0 : index
    %64 = vector.load %arg6[%c0_45, %c0_46] : memref<8x384xf32, #tpu.memory_space<vmem>>, vector<8x384xf32>
    %c0_47 = arith.constant 0 : index
    %c0_48 = arith.constant 0 : index
    %c0_49 = arith.constant 0 : index
    %65 = vector.load %arg1[%c0_47, %c0_48, %c0_49] : memref<5x8x80xbf16, #tpu.memory_space<vmem>>, vector<1x8x80xbf16>
    %66 = vector.shape_cast %65 : vector<1x8x80xbf16> to vector<8x80xbf16>
    %cst_50 = arith.constant dense<0.000000e+00> : vector<8x384xf32>
    %67 = tpu.matmul %66, %63, %cst_50 {dimension_numbers = #tpu.dot_dimension_numbers<[1], [0], [0], [1], [0, 0, 1, 1], [], []>} : vector<8x80xbf16>, vector<80x384xbf16>, vector<8x384xf32> -> vector<8x384xf32>
    %68 = arith.addf %64, %67 : vector<8x384xf32>
    %c0_51 = arith.constant 0 : index
    %c0_52 = arith.constant 0 : index
    %69 = vector.load %arg6[%c0_51, %c0_52] : memref<8x384xf32, #tpu.memory_space<vmem>>, vector<8x384xf32>
    tpu.vector_store %arg6[%c0_51, %c0_52], %68 {strides = array<i32>} : memref<8x384xf32, #tpu.memory_space<vmem>>, vector<8x384xf32>,
    %70 = vector.extract_strided_slice %57 {offsets = [0, 24], sizes = [16, 384], strides = [1, 1]} : vector<16x504xbf16> to vector<16x384xbf16>
    %71 = vector.extract_strided_slice %57 {offsets = [0, 25], sizes = [16, 384], strides = [1, 1]} : vector<16x504xbf16> to vector<16x384xbf16>
    %72 = vector.extract_strided_slice %57 {offsets = [0, 26], sizes = [16, 384], strides = [1, 1]} : vector<16x504xbf16> to vector<16x384xbf16>
    %73 = vector.extract_strided_slice %57 {offsets = [0, 27], sizes = [16, 384], strides = [1, 1]} : vector<16x504xbf16> to vector<16x384xbf16>
    %74 = vector.extract_strided_slice %57 {offsets = [0, 28], sizes = [16, 384], strides = [1, 1]} : vector<16x504xbf16> to vector<16x384xbf16>
    %75 = tpu.concatenate %70, %71, %72, %73, %74 in 0 : vector<16x384xbf16>, vector<16x384xbf16>, vector<16x384xbf16>, vector<16x384xbf16>, vector<16x384xbf16> -> vector<80x384xbf16>
    %c0_53 = arith.constant 0 : index
    %c0_54 = arith.constant 0 : index
    %76 = vector.load %arg6[%c0_53, %c0_54] : memref<8x384xf32, #tpu.memory_space<vmem>>, vector<8x384xf32>
    %c1 = arith.constant 1 : index
    %c0_55 = arith.constant 0 : index
    %c0_56 = arith.constant 0 : index
    %77 = vector.load %arg1[%c1, %c0_55, %c0_56] : memref<5x8x80xbf16, #tpu.memory_space<vmem>>, vector<1x8x80xbf16>
    %78 = vector.shape_cast %77 : vector<1x8x80xbf16> to vector<8x80xbf16>
    %cst_57 = arith.constant dense<0.000000e+00> : vector<8x384xf32>
    %79 = tpu.matmul %78, %75, %cst_57 {dimension_numbers = #tpu.dot_dimension_numbers<[1], [0], [0], [1], [0, 0, 1, 1], [], []>} : vector<8x80xbf16>, vector<80x384xbf16>, vector<8x384xf32> -> vector<8x384xf32>
    %80 = arith.addf %76, %79 : vector<8x384xf32>
    %c0_58 = arith.constant 0 : index
    %c0_59 = arith.constant 0 : index
    %81 = vector.load %arg6[%c0_58, %c0_59] : memref<8x384xf32, #tpu.memory_space<vmem>>, vector<8x384xf32>
    tpu.vector_store %arg6[%c0_58, %c0_59], %80 {strides = array<i32>} : memref<8x384xf32, #tpu.memory_space<vmem>>, vector<8x384xf32>,
    %82 = vector.extract_strided_slice %57 {offsets = [0, 48], sizes = [16, 384], strides = [1, 1]} : vector<16x504xbf16> to vector<16x384xbf16>
    %83 = vector.extract_strided_slice %57 {offsets = [0, 49], sizes = [16, 384], strides = [1, 1]} : vector<16x504xbf16> to vector<16x384xbf16>
    %84 = vector.extract_strided_slice %57 {offsets = [0, 50], sizes = [16, 384], strides = [1, 1]} : vector<16x504xbf16> to vector<16x384xbf16>
    %85 = vector.extract_strided_slice %57 {offsets = [0, 51], sizes = [16, 384], strides = [1, 1]} : vector<16x504xbf16> to vector<16x384xbf16>
    %86 = vector.extract_strided_slice %57 {offsets = [0, 52], sizes = [16, 384], strides = [1, 1]} : vector<16x504xbf16> to vector<16x384xbf16>
    %87 = tpu.concatenate %82, %83, %84, %85, %86 in 0 : vector<16x384xbf16>, vector<16x384xbf16>, vector<16x384xbf16>, vector<16x384xbf16>, vector<16x384xbf16> -> vector<80x384xbf16>
    %c0_60 = arith.constant 0 : index
    %c0_61 = arith.constant 0 : index
    %88 = vector.load %arg6[%c0_60, %c0_61] : memref<8x384xf32, #tpu.memory_space<vmem>>, vector<8x384xf32>
    %c2 = arith.constant 2 : index
    %c0_62 = arith.constant 0 : index
    %c0_63 = arith.constant 0 : index
    %89 = vector.load %arg1[%c2, %c0_62, %c0_63] : memref<5x8x80xbf16, #tpu.memory_space<vmem>>, vector<1x8x80xbf16>
    %90 = vector.shape_cast %89 : vector<1x8x80xbf16> to vector<8x80xbf16>
    %cst_64 = arith.constant dense<0.000000e+00> : vector<8x384xf32>
    %91 = tpu.matmul %90, %87, %cst_64 {dimension_numbers = #tpu.dot_dimension_numbers<[1], [0], [0], [1], [0, 0, 1, 1], [], []>} : vector<8x80xbf16>, vector<80x384xbf16>, vector<8x384xf32> -> vector<8x384xf32>
    %92 = arith.addf %88, %91 : vector<8x384xf32>
    %c0_65 = arith.constant 0 : index
    %c0_66 = arith.constant 0 : index
    %93 = vector.load %arg6[%c0_65, %c0_66] : memref<8x384xf32, #tpu.memory_space<vmem>>, vector<8x384xf32>
    tpu.vector_store %arg6[%c0_65, %c0_66], %92 {strides = array<i32>} : memref<8x384xf32, #tpu.memory_space<vmem>>, vector<8x384xf32>,
    %94 = vector.extract_strided_slice %57 {offsets = [0, 72], sizes = [16, 384], strides = [1, 1]} : vector<16x504xbf16> to vector<16x384xbf16>
    %95 = vector.extract_strided_slice %57 {offsets = [0, 73], sizes = [16, 384], strides = [1, 1]} : vector<16x504xbf16> to vector<16x384xbf16>
    %96 = vector.extract_strided_slice %57 {offsets = [0, 74], sizes = [16, 384], strides = [1, 1]} : vector<16x504xbf16> to vector<16x384xbf16>
    %97 = vector.extract_strided_slice %57 {offsets = [0, 75], sizes = [16, 384], strides = [1, 1]} : vector<16x504xbf16> to vector<16x384xbf16>
    %98 = vector.extract_strided_slice %57 {offsets = [0, 76], sizes = [16, 384], strides = [1, 1]} : vector<16x504xbf16> to vector<16x384xbf16>
    %99 = tpu.concatenate %94, %95, %96, %97, %98 in 0 : vector<16x384xbf16>, vector<16x384xbf16>, vector<16x384xbf16>, vector<16x384xbf16>, vector<16x384xbf16> -> vector<80x384xbf16>
    %c0_67 = arith.constant 0 : index
    %c0_68 = arith.constant 0 : index
    %100 = vector.load %arg6[%c0_67, %c0_68] : memref<8x384xf32, #tpu.memory_space<vmem>>, vector<8x384xf32>
    %c3 = arith.constant 3 : index
    %c0_69 = arith.constant 0 : index
    %c0_70 = arith.constant 0 : index
    %101 = vector.load %arg1[%c3, %c0_69, %c0_70] : memref<5x8x80xbf16, #tpu.memory_space<vmem>>, vector<1x8x80xbf16>
    %102 = vector.shape_cast %101 : vector<1x8x80xbf16> to vector<8x80xbf16>
    %cst_71 = arith.constant dense<0.000000e+00> : vector<8x384xf32>
    %103 = tpu.matmul %102, %99, %cst_71 {dimension_numbers = #tpu.dot_dimension_numbers<[1], [0], [0], [1], [0, 0, 1, 1], [], []>} : vector<8x80xbf16>, vector<80x384xbf16>, vector<8x384xf32> -> vector<8x384xf32>
    %104 = arith.addf %100, %103 : vector<8x384xf32>
    %c0_72 = arith.constant 0 : index
    %c0_73 = arith.constant 0 : index
    %105 = vector.load %arg6[%c0_72, %c0_73] : memref<8x384xf32, #tpu.memory_space<vmem>>, vector<8x384xf32>
    tpu.vector_store %arg6[%c0_72, %c0_73], %104 {strides = array<i32>} : memref<8x384xf32, #tpu.memory_space<vmem>>, vector<8x384xf32>,
    %106 = vector.extract_strided_slice %57 {offsets = [0, 96], sizes = [16, 384], strides = [1, 1]} : vector<16x504xbf16> to vector<16x384xbf16>
    %107 = vector.extract_strided_slice %57 {offsets = [0, 97], sizes = [16, 384], strides = [1, 1]} : vector<16x504xbf16> to vector<16x384xbf16>
    %108 = vector.extract_strided_slice %57 {offsets = [0, 98], sizes = [16, 384], strides = [1, 1]} : vector<16x504xbf16> to vector<16x384xbf16>
    %109 = vector.extract_strided_slice %57 {offsets = [0, 99], sizes = [16, 384], strides = [1, 1]} : vector<16x504xbf16> to vector<16x384xbf16>
    %110 = vector.extract_strided_slice %57 {offsets = [0, 100], sizes = [16, 384], strides = [1, 1]} : vector<16x504xbf16> to vector<16x384xbf16>
    %111 = tpu.concatenate %106, %107, %108, %109, %110 in 0 : vector<16x384xbf16>, vector<16x384xbf16>, vector<16x384xbf16>, vector<16x384xbf16>, vector<16x384xbf16> -> vector<80x384xbf16>
    %c0_74 = arith.constant 0 : index
    %c0_75 = arith.constant 0 : index
    %112 = vector.load %arg6[%c0_74, %c0_75] : memref<8x384xf32, #tpu.memory_space<vmem>>, vector<8x384xf32>
    %c4 = arith.constant 4 : index
    %c0_76 = arith.constant 0 : index
    %c0_77 = arith.constant 0 : index
    %113 = vector.load %arg1[%c4, %c0_76, %c0_77] : memref<5x8x80xbf16, #tpu.memory_space<vmem>>, vector<1x8x80xbf16>
    %114 = vector.shape_cast %113 : vector<1x8x80xbf16> to vector<8x80xbf16>
    %cst_78 = arith.constant dense<0.000000e+00> : vector<8x384xf32>
    %115 = tpu.matmul %114, %111, %cst_78 {dimension_numbers = #tpu.dot_dimension_numbers<[1], [0], [0], [1], [0, 0, 1, 1], [], []>} : vector<8x80xbf16>, vector<80x384xbf16>, vector<8x384xf32> -> vector<8x384xf32>
    %116 = arith.addf %112, %115 : vector<8x384xf32>
    %c0_79 = arith.constant 0 : index
    %c0_80 = arith.constant 0 : index
    %117 = vector.load %arg6[%c0_79, %c0_80] : memref<8x384xf32, #tpu.memory_space<vmem>>, vector<8x384xf32>
    tpu.vector_store %arg6[%c0_79, %c0_80], %116 {strides = array<i32>} : memref<8x384xf32, #tpu.memory_space<vmem>>, vector<8x384xf32>,
    %c0_81 = arith.constant 0 : index
    %c0_82 = arith.constant 0 : index
    %118 = vector.load %arg6[%c0_81, %c0_82] : memref<8x384xf32, #tpu.memory_space<vmem>>, vector<8x384xf32>
    %c0_83 = arith.constant 0 : index
    %c0_84 = arith.constant 0 : index
    %119 = vector.load %arg2[%c0_83, %c0_84] : memref<8x1xf32, #tpu.memory_space<vmem>>, vector<8x1xf32>
    %120 = vector.broadcast %119 : vector<8x1xf32> to vector<8x384xf32>
    %121 = arith.addf %118, %120 : vector<8x384xf32>
    %c0_85 = arith.constant 0 : index
    %c0_86 = arith.constant 0 : index
    %c0_87 = arith.constant 0 : index
    %122 = vector.load %arg4[%c0_85, %c0_86, %c0_87] : memref<1x8x384xf32, #tpu.memory_space<vmem>>, vector<1x8x384xf32>
    %123 = vector.shape_cast %122 : vector<1x8x384xf32> to vector<8x384xf32>
    %124 = vector.shape_cast %121 : vector<8x384xf32> to vector<1x8x384xf32>
    tpu.vector_store %arg4[%c0_85, %c0_86, %c0_87], %124 {strides = array<i32>} : memref<1x8x384xf32, #tpu.memory_space<vmem>>, vector<1x8x384xf32>,
    return
  }
  func.func @transform_0(%arg0: i32) -> (i32, i32, i32) {
    %c0_i32 = arith.constant 0 : i32
    %c0_i32_0 = arith.constant 0 : i32
    %c0_i32_1 = arith.constant 0 : i32
    %c0_i32_2 = arith.constant 0 : i32
    return %c0_i32, %c0_i32_0, %c0_i32_1 : i32, i32, i32
  }
  func.func @transform_1(%arg0: i32) -> (i32, i32) {
    %c0_i32 = arith.constant 0 : i32
    %c0_i32_0 = arith.constant 0 : i32
    %c0_i32_1 = arith.constant 0 : i32
    return %c0_i32, %c0_i32_0 : i32, i32
  }
  func.func @transform_2(%arg0: i32) -> (i32, i32, i32, i32) {
    %c0_i32 = arith.constant 0 : i32
    %c0_i32_0 = arith.constant 0 : i32
    %c0_i32_1 = arith.constant 0 : i32
    %c0_i32_2 = arith.constant 0 : i32
    return %arg0, %c0_i32, %c0_i32_0, %c0_i32_1 : i32, i32, i32, i32
  }
  func.func @transform_3(%arg0: i32) -> (i32, i32, i32) {
    %c0_i32 = arith.constant 0 : i32
    %c0_i32_0 = arith.constant 0 : i32
    %c0_i32_1 = arith.constant 0 : i32
    return %arg0, %c0_i32, %c0_i32_0 : i32, i32, i32
  }
}

</mosaic_0001>

<llo_original>
// kernel: tpu_custom_call.1
$region0: #{tpu_custom_call.1}
  #allocation0 [shape = 'u32[]', space=smem, size = 0x4, offset = 0x4, fixed_abs, tag = 'smem constant byte address 0x4 - core index']
  #allocation1 [shape = 'u32[144,128]{1,0:T(1,128)}', space=vmem, size = 0x12000, scoped, tag = 'internal scratch']
  #allocation2 [shape = 'bf16[1,16,504]{2,1,0:T(8,128)(2,1)}', space=vmem, size = 0x4000, scoped, tag = 'scratch operand']
  #allocation3 [shape = 'f32[8,384]{1,0:T(8,128)}', space=vmem, size = 0x3000, scoped, tag = 'scratch operand']
  %s0 = inlined_call_operand.hbm [shape: bf16[5,8,80], index: 0, kind: input, shape index: {}]
  %s1 = inlined_call_operand.vmem [shape: f32[8,1], index: 1, kind: input, shape index: {}]
  %s2 = inlined_call_operand.hbm [shape: f32[2,4,16,16], index: 2, kind: input, shape index: {}]
  %s3 = inlined_call_operand.hbm [shape: f32[2,8,384], index: 3, kind: output, shape index: {}]
  %s4 = sld [smem:[#allocation0]]
  $region53: #{tpu_custom_call.1} parent=0
    _
  %s6 = ssub.s32 1, %s4
  %s7 = scalar_select 0, %s6, %s4
  $region1: #{tpu_custom_call.1} parent=0
    #allocation4 [shape = 'u8[10240]{0}', space=vmem, size = 0x2800, scoped, tag = 'input window, operand 0, single buffered']
    #allocation5 [shape = 's32[2]{0}', space=sflag, size = 0x8, scoped, tag = 'scoped memory for tpu_custom_call.1']
    #allocation6 [shape = 's32[2]{0}', space=sflag, size = 0x8, scoped, tag = 'scoped memory for tpu_custom_call.1']
    #allocation7 [shape = 'u8[65536]{0}', space=vmem, size = 0x10000, scoped, tag = 'input window, operand 2']
    #allocation8 [shape = 's32[2]{0}', space=sflag, size = 0x8, scoped, tag = 'scoped memory for tpu_custom_call.1']
    #allocation9 [shape = 'u8[24576]{0}', space=vmem, size = 0x6000, scoped, tag = 'output window, operand 0']
    %8 = vsyncpa [#allocation5], 0
    %9 = vsyncpa [#allocation8], 0
    %s10 = scalar_lea.sflag [#allocation8], 1
    %11 = vsyncpa %s10, 0
    %12 = vsyncpa [#allocation6], 0
    %s13 = scalar_lea.sflag [#allocation6], 1
    %14 = vsyncpa %s13, 0
    loop: start=0, step=1, limit=4
    $region2: #{tpu_custom_call.1} parent=1 // loop_pre_header
      _
    $region3: #{tpu_custom_call.1} parent=1 // loop_header
      %s16 = sphi 0, %s20
      %p17 = scmp.ge.s32.totalorder %s16, 4
      %s24 = sphi 0, %s24
      %s26 = sphi 0, %s24
      %s27 = sphi 0, %s26
      %s41 = sphi 0, %s27
      %s45 = sphi 0, %s45
      %s47 = sphi 0, %s45
      %s48 = sphi 0, %s47
      %s62 = sphi 0, %s48
      %s68 = sphi 0, %s70
      %s71 = sphi 0, %s68
      %s72 = sphi 0, %s71
      %s88 = sphi 0, %s72
      %s94 = sphi 0, %s96
      %s97 = sphi 0, %s94
      %s98 = sphi 0, %s97
      %s114 = sphi 0, %s98
    $region4: #{tpu_custom_call.1} parent=1 // loop_header_branch
      %19 = sbr.rel (%p17) target = $region8
    $region5: #{tpu_custom_call.1} parent=1 // loop_body
      %s21 = ssub.s32 %s16, 1
      %s22 = ssub.s32 %s16, 2
      %s23 = sadd.s32 %s16, 1
      %s25 = sadd.s32 %s24, 1
      %p28 = scmp.eq.s32.totalorder %s16, 1
      %p29 = scmp.ne.s32.totalorder %s24, %s26
      %p30 = scmp.eq.s32.totalorder %s16, 0
      %p31 = por %p29, %p30
      %p32 = scmp.ne.s32.totalorder %s24, %s26
      %p33 = scmp.eq.s32.totalorder %s21, 1
      %p34 = por %p32, %p33
      %p35 = scmp.ne.s32.totalorder %s26, %s27
      %p36 = scmp.eq.s32.totalorder %s21, 0
      %p37 = por %p35, %p36
      %p38 = scmp.ne.s32.totalorder %s26, %s27
      %p39 = scmp.eq.s32.totalorder %s22, 1
      %p40 = por %p38, %p39
      %p42 = scmp.ne.s32.totalorder %s27, %s41
      %p43 = scmp.eq.s32.totalorder %s22, 0
      %p44 = por %p42, %p43
      %s46 = sadd.s32 %s45, 1
      %p49 = scmp.eq.s32.totalorder %s16, 1
      %p50 = scmp.ne.s32.totalorder %s45, %s47
      %p51 = scmp.eq.s32.totalorder %s16, 0
      %p52 = por %p50, %p51
      %p53 = scmp.ne.s32.totalorder %s45, %s47
      %p54 = scmp.eq.s32.totalorder %s21, 1
      %p55 = por %p53, %p54
      %p56 = scmp.ne.s32.totalorder %s47, %s48
      %p57 = scmp.eq.s32.totalorder %s21, 0
      %p58 = por %p56, %p57
      %p59 = scmp.ne.s32.totalorder %s47, %s48
      %p60 = scmp.eq.s32.totalorder %s22, 1
      %p61 = por %p59, %p60
      %p63 = scmp.ne.s32.totalorder %s48, %s62
      %p64 = scmp.eq.s32.totalorder %s22, 0
      %p65 = por %p63, %p64
      %s66 = ssub.s32 %s16, %s23
      %p67 = scmp.eq.s32.totalorder %s66, 0
      %s69 = sadd.s32 %s68, 1
      %s70 = scalar_select %p67, %s68, %s69
      %p73 = pneg %p67
      %p74 = scmp.eq.s32.totalorder %s16, 1
      %p75 = por %p73, %p74
      %p76 = scmp.ne.s32.totalorder %s68, %s71
      %p77 = scmp.eq.s32.totalorder %s16, 0
      %p78 = por %p76, %p77
      %p79 = scmp.ne.s32.totalorder %s68, %s71
      %p80 = scmp.eq.s32.totalorder %s21, 1
      %p81 = por %p79, %p80
      %p82 = scmp.ne.s32.totalorder %s71, %s72
      %p83 = scmp.eq.s32.totalorder %s21, 0
      %p84 = por %p82, %p83
      %p85 = scmp.ne.s32.totalorder %s71, %s72
      %p86 = scmp.eq.s32.totalorder %s22, 1
      %p87 = por %p85, %p86
      %p89 = scmp.ne.s32.totalorder %s72, %s88
      %p90 = scmp.eq.s32.totalorder %s22, 0
      %p91 = por %p89, %p90
      %s92 = ssub.s32 %s16, %s23
      %p93 = scmp.eq.s32.totalorder %s92, 0
      %s95 = sadd.s32 %s94, 1
      %s96 = scalar_select %p93, %s94, %s95
      %p99 = pneg %p93
      %p100 = scmp.eq.s32.totalorder %s16, 1
      %p101 = por %p99, %p100
      %p102 = scmp.ne.s32.totalorder %s94, %s97
      %p103 = scmp.eq.s32.totalorder %s16, 0
      %p104 = por %p102, %p103
      %p105 = scmp.ne.s32.totalorder %s94, %s97
      %p106 = scmp.eq.s32.totalorder %s21, 1
      %p107 = por %p105, %p106
      %p108 = scmp.ne.s32.totalorder %s97, %s98
      %p109 = scmp.eq.s32.totalorder %s21, 0
      %p110 = por %p108, %p109
      %p111 = scmp.ne.s32.totalorder %s97, %s98
      %p112 = scmp.eq.s32.totalorder %s22, 1
      %p113 = por %p111, %p112
      %p115 = scmp.ne.s32.totalorder %s98, %s114
      %p116 = scmp.eq.s32.totalorder %s22, 0
      %p117 = por %p115, %p116
      %p118 = scmp.le.s32.totalorder 1, %s16
      %p119 = scmp.lt.s32.totalorder %s16, 3
      %p120 = pnand %p118, %p119
      %p121 = pneg %p120
      // Predicated region
      $region9: #{tpu_custom_call.1} parent=5 // pred_check
        _
      $region10: #{tpu_custom_call.1} parent=5 // pred_check_branch
        %123 = sbr.rel (%p120) target = $region12
      $region11: #{tpu_custom_call.1} parent=5 // pred_region
        %s124 = ssub.s32 %s16, 1
        // Predicated region
        $region13: #{tpu_custom_call.1} parent=11 // pred_check
          %p125 = pneg %p37
        $region14: #{tpu_custom_call.1} parent=11 // pred_check_branch
          %127 = sbr.rel (%p125) target = $region16
        $region15: #{tpu_custom_call.1} parent=11 // pred_region
          %s129 = ssub.s32 320, 320
          %130 = vsyncadd [#allocation5], %s129
          %s131 = sshll.u32 [#allocation4], 4
          %s132 = int_to_ptr.vmem [resolvable:$true] %s131
          %137 = dma.hbm_to_vmem [thread:$0]  %s0, 320, %s132, [#allocation5], 64, 64, 4
        $region16: #{tpu_custom_call.1} parent=11 // pred_fallthru
          _
        // Predicated region
        $region17: #{tpu_custom_call.1} parent=11 // pred_check
          %p138 = pneg %p58
        $region18: #{tpu_custom_call.1} parent=11 // pred_check_branch
          %140 = sbr.rel (%p138) target = $region20
        $region19: #{tpu_custom_call.1} parent=11 // pred_region
          _
        $region20: #{tpu_custom_call.1} parent=11 // pred_fallthru
          _
      $region12: #{tpu_custom_call.1} parent=5 // pred_fallthru
        _
      %p141 = scmp.lt.s32.totalorder %s16, 2
      // Predicated region
      $region21: #{tpu_custom_call.1} parent=5 // pred_check
        %p142 = pneg %p141
      $region22: #{tpu_custom_call.1} parent=5 // pred_check_branch
        %144 = sbr.rel (%p142) target = $region24
      $region23: #{tpu_custom_call.1} parent=5 // pred_region
        // Predicated region
        $region25: #{tpu_custom_call.1} parent=23 // pred_check
          %p145 = pneg %p78
        $region26: #{tpu_custom_call.1} parent=23 // pred_check_branch
          %147 = sbr.rel (%p145) target = $region28
        $region27: #{tpu_custom_call.1} parent=23 // pred_region
          %s148 = sand.u32 %s68, 1
          %s149 = scalar_lea.sflag [#allocation8], %s148
          %s150 = sand.u32 %s68, 1
          %s151 = smul.addr %s150, 64
          %s152 = scalar_lea.vmem [#allocation7], %s151
          %s154 = ssub.s32 1024, 1024
          %155 = vsyncadd %s149, %s154
          %s156 = smul.addr %s16, 8
          %s157 = smul.addr %s156, 128
          %s158 = scalar_lea.hbm %s2, %s157
          %s159 = sshll.u32 %s152, 4
          %s160 = int_to_ptr.vmem [resolvable:$true] %s159
          %165 = dma.hbm_to_vmem [thread:$0]  %s158, 1024, %s160, %s149, 128, 128, 8
        $region28: #{tpu_custom_call.1} parent=23 // pred_fallthru
          _
      $region24: #{tpu_custom_call.1} parent=5 // pred_fallthru
        _
      %p166 = scmp.le.s32.totalorder 1, %s16
      %p167 = scmp.lt.s32.totalorder %s16, 3
      %p168 = pnand %p166, %p167
      %p169 = pneg %p168
      // Predicated region
      $region29: #{tpu_custom_call.1} parent=5 // pred_check
        _
      $region30: #{tpu_custom_call.1} parent=5 // pred_check_branch
        %171 = sbr.rel (%p168) target = $region32
      $region31: #{tpu_custom_call.1} parent=5 // pred_region
        %s172 = ssub.s32 %s16, 1
        // Predicated region
        $region33: #{tpu_custom_call.1} parent=31 // pred_check
          %p173 = pneg %p37
        $region34: #{tpu_custom_call.1} parent=31 // pred_check_branch
          %175 = sbr.rel (%p173) target = $region36
        $region35: #{tpu_custom_call.1} parent=31 // pred_region
          %176 = dma.done [#allocation5], 320
        $region36: #{tpu_custom_call.1} parent=31 // pred_fallthru
          _
        %s177 = sand.u32 %s71, 1
        %s178 = scalar_lea.sflag [#allocation8], %s177
        %s179 = sand.u32 %s71, 1
        %s180 = smul.addr %s179, 64
        %s181 = scalar_lea.vmem [#allocation7], %s180
        // Predicated region
        $region37: #{tpu_custom_call.1} parent=31 // pred_check
          %p182 = pneg %p84
        $region38: #{tpu_custom_call.1} parent=31 // pred_check_branch
          %184 = sbr.rel (%p182) target = $region40
        $region39: #{tpu_custom_call.1} parent=31 // pred_region
          %185 = dma.done %s178, 1024
        $region40: #{tpu_custom_call.1} parent=31 // pred_fallthru
          _
        %p186 = pneg %p37
        %p187 = pneg %p34
        %p188 = pneg %p58
        %p189 = pneg %p55
        %s190 = sand.u32 %s71, 1
        %s191 = scalar_lea.sflag [#allocation8], %s190
        %s192 = sand.u32 %s71, 1
        %s193 = smul.addr %s192, 64
        %s194 = scalar_lea.vmem [#allocation7], %s193
        %p195 = pneg %p84
        %p196 = pneg %p81
        %p197 = pneg %p110
        %p198 = pneg %p107
        %s199 = sand.u32 %s97, 1
        %s200 = scalar_lea.sflag [#allocation6], %s199
        %s201 = sand.u32 %s97, 1
        %s202 = smul.addr %s201, 24
        %s203 = scalar_lea.vmem [#allocation9], %s202
        %v205 = vld [vmem:[%s181] sm:$0xff]
        %v206 = vld [vmem:[%s181 + $0x8] sm:$0xff]
        %v207 = vld [vmem:[%s181 + $0x10] sm:$0xff]
        %v208 = vld [vmem:[%s181 + $0x18] sm:$0xff]
        %v209 = vld [vmem:[%s181 + $0x20] sm:$0xff]
        %v210 = vld [vmem:[%s181 + $0x28] sm:$0xff]
        %v211 = vld [vmem:[%s181 + $0x30] sm:$0xff]
        %v212 = vld [vmem:[%s181 + $0x38] sm:$0xff]
        %v213 = vpack.c.bf16 %v206, %v205
        %v214 = vpack.c.bf16 %v208, %v207
        %v215 = vpack.c.bf16 %v210, %v209
        %v216 = vpack.c.bf16 %v212, %v211
        %217 = vst [vmem:[#allocation2] sm:$0xff] 0
        %vm218 = vcmask 1043456
        %vm219 = vcmask 982020
        %vm220 = vmor %vm219, %vm218
        %221 = vst.msk [vmem:[#allocation2 + $0x8] sm:$0xff] %vm220, 0
        %222 = vst [vmem:[#allocation2 + $0x10] sm:$0xff] 0
        %223 = vst.msk [vmem:[#allocation2 + $0x18] sm:$0xff] %vm220, 0
        %v229 = vunpack.c.l.b16 %v213
        %v230 = vunpack.c.l.b16 %v214
        %v231 = vunpack.c.l.b16 %v215
        %v232 = vunpack.c.l.b16 %v216
        %v233 = vunpack.c.l.b16 0
        %v234 = vpack.c.b16 %v229, %v229
        %v235 = vpack.c.b16 %v230, %v230
        %v236 = vpack.c.b16 %v231, %v231
        %v237 = vpack.c.b16 %v232, %v232
        %v238 = vpack.c.b16 %v233, %v233
        %v239 = vunpack.c.l.b16 %v234
        %v240 = vunpack.c.l.b16 %v235
        %v241 = vunpack.c.l.b16 %v236
        %v242 = vunpack.c.l.b16 %v237
        %v243 = vunpack.c.l.b16 %v238
        %v244 = vrot.slane %v240, 7
        %vm245 = vcmask 1041409
        %v246 = vsel %vm245, %v244, %v239
        %v247 = vrot.slane %v241, 6
        %vm248 = vcmask 1042434
        %v249 = vsel %vm248, %v247, %v246
        %v250 = vrot.slane %v242, 5
        %vm251 = vcmask 1043459
        %v252 = vsel %vm251, %v250, %v249
        %v253 = vrot.slane %v243, 4
        %vm254 = vcmask 1044484
        %v255 = vsel %vm254, %v253, %v252
        %v256 = vrot.slane %v243, 3
        %vm257 = vcmask 1045509
        %v258 = vsel %vm257, %v256, %v255
        %v259 = vrot.slane %v243, 2
        %vm260 = vcmask 1046534
        %v261 = vsel %vm260, %v259, %v258
        %v262 = vrot.slane %v243, 1
        %vm263 = vcmask 1047559
        %v264 = vsel %vm263, %v262, %v261
        %v265 = vrot.slane %v243, 7
        %v266 = vsel %vm245, %v265, %v243
        %v267 = vrot.slane %v243, 6
        %v268 = vsel %vm248, %v267, %v266
        %v269 = vrot.slane %v243, 5
        %v270 = vsel %vm251, %v269, %v268
        %v271 = vsel %vm254, %v253, %v270
        %v272 = vsel %vm257, %v256, %v271
        %v273 = vsel %vm260, %v259, %v272
        %v274 = vsel %vm263, %v262, %v273
        %v275 = vpack.c.b16 %v264, %v264
        %v276 = vpack.c.b16 %v274, %v274
        %277 = vrot.lane.b32.xlu0 %v275, 50
        %v278 = vpop.permute.xlu0 %277
        %279 = vrot.lane.b32.xlu0 %v276, 50
        %v280 = vpop.permute.xlu0 %279
        %vm283 = vcmask 535952
        %284 = vst.msk [vmem:[#allocation2] sm:$0xf] %vm283, %v278
        %285 = vst.msk [vmem:[#allocation2 + $0x10] sm:$0xf] %vm283, %v280
        %v286 = vrot.slane %v239, 1
        %v287 = vsel %vm245, %v240, %v286
        %v288 = vrot.slane %v241, 7
        %v289 = vsel %vm248, %v288, %v287
        %v290 = vrot.slane %v242, 6
        %v291 = vsel %vm251, %v290, %v289
        %v292 = vsel %vm254, %v269, %v291
        %v293 = vsel %vm257, %v253, %v292
        %v294 = vsel %vm260, %v256, %v293
        %v295 = vsel %vm263, %v259, %v294
        %v296 = vsel %vm245, %v243, %v262
        %v297 = vsel %vm248, %v265, %v296
        %v298 = vsel %vm251, %v267, %v297
        %v299 = vsel %vm254, %v269, %v298
        %v300 = vsel %vm257, %v253, %v299
        %v301 = vsel %vm260, %v256, %v300
        %v302 = vsel %vm263, %v259, %v301
        %v303 = vpack.c.b16 %v295, %v295
        %v304 = vpack.c.b16 %v302, %v302
        %305 = vrot.lane.b32.xlu0 %v303, 74
        %v306 = vpop.permute.xlu0 %305
        %307 = vrot.lane.b32.xlu0 %v304, 74
        %v308 = vpop.permute.xlu0 %307
        %vm311 = vcmask 732752
        %312 = vst.msk [vmem:[#allocation2] sm:$0xf] %vm311, %v306
        %313 = vst.msk [vmem:[#allocation2 + $0x10] sm:$0xf] %vm311, %v308
        %v314 = vrot.slane %v239, 2
        %v315 = vrot.slane %v240, 1
        %v316 = vsel %vm245, %v315, %v314
        %v317 = vsel %vm248, %v241, %v316
        %v318 = vrot.slane %v242, 7
        %v319 = vsel %vm251, %v318, %v317
        %v320 = vsel %vm254, %v267, %v319
        %v321 = vsel %vm257, %v269, %v320
        %v322 = vsel %vm260, %v253, %v321
        %v323 = vsel %vm263, %v256, %v322
        %v324 = vsel %vm245, %v262, %v259
        %v325 = vsel %vm248, %v243, %v324
        %v326 = vsel %vm251, %v265, %v325
        %v327 = vsel %vm254, %v267, %v326
        %v328 = vsel %vm257, %v269, %v327
        %v329 = vsel %vm260, %v253, %v328
        %v330 = vsel %vm263, %v256, %v329
        %v331 = vpack.c.b16 %v323, %v323
        %v332 = vpack.c.b16 %v330, %v330
        %333 = vrot.lane.b32.xlu0 %v331, 98
        %v334 = vpop.permute.xlu0 %333
        %335 = vrot.lane.b32.xlu0 %v332, 98
        %v336 = vpop.permute.xlu0 %335
        %vm339 = vcmask 929552
        %340 = vst.msk [vmem:[#allocation2] sm:$0xf] %vm339, %v334
        %341 = vst.msk [vmem:[#allocation2 + $0x10] sm:$0xf] %vm339, %v336
        %v342 = vrot.slane %v239, 3
        %v343 = vrot.slane %v240, 2
        %v344 = vsel %vm245, %v343, %v342
        %v345 = vrot.slane %v241, 1
        %v346 = vsel %vm248, %v345, %v344
        %v347 = vsel %vm251, %v242, %v346
        %v348 = vsel %vm254, %v265, %v347
        %v349 = vsel %vm257, %v267, %v348
        %v350 = vsel %vm260, %v269, %v349
        %v351 = vsel %vm263, %v253, %v350
        %v352 = vsel %vm245, %v259, %v256
        %v353 = vsel %vm248, %v262, %v352
        %v354 = vsel %vm251, %v243, %v353
        %v355 = vsel %vm254, %v265, %v354
        %v356 = vsel %vm257, %v267, %v355
        %v357 = vsel %vm260, %v269, %v356
        %v358 = vsel %vm263, %v253, %v357
        %v359 = vpack.c.b16 %v351, %v351
        %v360 = vpack.c.b16 %v358, %v358
        %361 = vrot.lane.b32.xlu0 %v359, 122
        %v362 = vpop.permute.xlu0 %361
        %363 = vrot.lane.b32.xlu0 %v360, 122
        %v364 = vpop.permute.xlu0 %363
        %v365 = vrot.slane %v362, 4
        %v366 = vrot.slane %v364, 4
        %vm367 = vcmask 998400
        %v368 = vsel %vm367, %v365, %v362
        %v369 = vsel %vm367, %v366, %v364
        %vm372 = vcmask 1044432
        %vm373 = vcmask 80900
        %vm374 = vmor %vm373, %vm372
        %375 = vst.msk [vmem:[#allocation2] sm:$0xff] %vm374, %v368
        %376 = vst.msk [vmem:[#allocation2 + $0x10] sm:$0xff] %vm374, %v369
        %v377 = vrot.slane %v239, 4
        %v378 = vrot.slane %v240, 3
        %v379 = vsel %vm245, %v378, %v377
        %v380 = vrot.slane %v241, 2
        %v381 = vsel %vm248, %v380, %v379
        %v382 = vrot.slane %v242, 1
        %v383 = vsel %vm251, %v382, %v381
        %v384 = vsel %vm254, %v243, %v383
        %v385 = vsel %vm257, %v265, %v384
        %v386 = vsel %vm260, %v267, %v385
        %v387 = vsel %vm263, %v269, %v386
        %v388 = vsel %vm245, %v256, %v253
        %v389 = vsel %vm248, %v259, %v388
        %v390 = vsel %vm251, %v262, %v389
        %v391 = vsel %vm254, %v243, %v390
        %v392 = vsel %vm257, %v265, %v391
        %v393 = vsel %vm260, %v267, %v392
        %v394 = vsel %vm263, %v269, %v393
        %v395 = vpack.c.b16 %v387, %v387
        %v396 = vpack.c.b16 %v394, %v394
        %397 = vrot.lane.b32.xlu0 %v395, 18
        %v398 = vpop.permute.xlu0 %397
        %399 = vrot.lane.b32.xlu0 %v396, 18
        %v400 = vpop.permute.xlu0 %399
        %vm403 = vcmask 273552
        %404 = vst.msk [vmem:[#allocation2 + $0x4] sm:$0xf] %vm403, %v398
        %405 = vst.msk [vmem:[#allocation2 + $0x14] sm:$0xf] %vm403, %v400
        %v406 = vrot.slane %v239, 5
        %v407 = vrot.slane %v240, 4
        %v408 = vsel %vm245, %v407, %v406
        %v409 = vrot.slane %v241, 3
        %v410 = vsel %vm248, %v409, %v408
        %v411 = vrot.slane %v242, 2
        %v412 = vsel %vm251, %v411, %v410
        %v413 = vsel %vm254, %v262, %v412
        %v414 = vsel %vm257, %v243, %v413
        %v415 = vsel %vm260, %v265, %v414
        %v416 = vsel %vm263, %v267, %v415
        %v417 = vsel %vm245, %v253, %v269
        %v418 = vsel %vm248, %v256, %v417
        %v419 = vsel %vm251, %v259, %v418
        %v420 = vsel %vm254, %v262, %v419
        %v421 = vsel %vm257, %v243, %v420
        %v422 = vsel %vm260, %v265, %v421
        %v423 = vsel %vm263, %v267, %v422
        %v424 = vpack.c.b16 %v416, %v416
        %v425 = vpack.c.b16 %v423, %v423
        %426 = vrot.lane.b32.xlu0 %v424, 42
        %v427 = vpop.permute.xlu0 %426
        %428 = vrot.lane.b32.xlu0 %v425, 42
        %v429 = vpop.permute.xlu0 %428
        %vm432 = vcmask 470352
        %433 = vst.msk [vmem:[#allocation2 + $0x4] sm:$0xf] %vm432, %v427
        %434 = vst.msk [vmem:[#allocation2 + $0x14] sm:$0xf] %vm432, %v429
        %v435 = vrot.slane %v239, 6
        %v436 = vrot.slane %v240, 5
        %v437 = vsel %vm245, %v436, %v435
        %v438 = vrot.slane %v241, 4
        %v439 = vsel %vm248, %v438, %v437
        %v440 = vrot.slane %v242, 3
        %v441 = vsel %vm251, %v440, %v439
        %v442 = vsel %vm254, %v259, %v441
        %v443 = vsel %vm257, %v262, %v442
        %v444 = vsel %vm260, %v243, %v443
        %v445 = vsel %vm263, %v265, %v444
        %v446 = vsel %vm245, %v269, %v267
        %v447 = vsel %vm248, %v253, %v446
        %v448 = vsel %vm251, %v256, %v447
        %v449 = vsel %vm254, %v259, %v448
        %v450 = vsel %vm257, %v262, %v449
        %v451 = vsel %vm260, %v243, %v450
        %v452 = vsel %vm263, %v265, %v451
        %v453 = vpack.c.b16 %v445, %v445
        %v454 = vpack.c.b16 %v452, %v452
        %455 = vrot.lane.b32.xlu0 %v453, 66
        %v456 = vpop.permute.xlu0 %455
        %457 = vrot.lane.b32.xlu0 %v454, 66
        %v458 = vpop.permute.xlu0 %457
        %vm461 = vcmask 667152
        %462 = vst.msk [vmem:[#allocation2 + $0x4] sm:$0xf] %vm461, %v456
        %463 = vst.msk [vmem:[#allocation2 + $0x14] sm:$0xf] %vm461, %v458
        %v464 = vrot.slane %v239, 7
        %v465 = vrot.slane %v240, 6
        %v466 = vsel %vm245, %v465, %v464
        %v467 = vrot.slane %v241, 5
        %v468 = vsel %vm248, %v467, %v466
        %v469 = vrot.slane %v242, 4
        %v470 = vsel %vm251, %v469, %v468
        %v471 = vsel %vm254, %v256, %v470
        %v472 = vsel %vm257, %v259, %v471
        %v473 = vsel %vm260, %v262, %v472
        %v474 = vsel %vm263, %v243, %v473
        %v475 = vsel %vm245, %v267, %v265
        %v476 = vsel %vm248, %v269, %v475
        %v477 = vsel %vm251, %v253, %v476
        %v478 = vsel %vm254, %v256, %v477
        %v479 = vsel %vm257, %v259, %v478
        %v480 = vsel %vm260, %v262, %v479
        %v481 = vsel %vm263, %v243, %v480
        %v482 = vpack.c.b16 %v474, %v474
        %v483 = vpack.c.b16 %v481, %v481
        %484 = vrot.lane.b32.xlu0 %v482, 90
        %v485 = vpop.permute.xlu0 %484
        %486 = vrot.lane.b32.xlu0 %v483, 90
        %v487 = vpop.permute.xlu0 %486
        %vm490 = vcmask 863952
        %491 = vst.msk [vmem:[#allocation2 + $0x4] sm:$0xf] %vm490, %v485
        %492 = vst.msk [vmem:[#allocation2 + $0x14] sm:$0xf] %vm490, %v487
        %v493 = vunpack.c.h.b16 %v213
        %v494 = vunpack.c.h.b16 %v214
        %v495 = vunpack.c.h.b16 %v215
        %v496 = vunpack.c.h.b16 %v216
        %v497 = vunpack.c.h.b16 0
        %v498 = vpack.c.b16 %v493, %v493
        %v499 = vpack.c.b16 %v494, %v494
        %v500 = vpack.c.b16 %v495, %v495
        %v501 = vpack.c.b16 %v496, %v496
        %v502 = vpack.c.b16 %v497, %v497
        %v503 = vunpack.c.l.b16 %v498
        %v504 = vunpack.c.l.b16 %v499
        %v505 = vunpack.c.l.b16 %v500
        %v506 = vunpack.c.l.b16 %v501
        %v507 = vunpack.c.l.b16 %v502
        %v508 = vrot.slane %v504, 7
        %v509 = vsel %vm245, %v508, %v503
        %v510 = vrot.slane %v505, 6
        %v511 = vsel %vm248, %v510, %v509
        %v512 = vrot.slane %v506, 5
        %v513 = vsel %vm251, %v512, %v511
        %v514 = vrot.slane %v507, 4
        %v515 = vsel %vm254, %v514, %v513
        %v516 = vrot.slane %v507, 3
        %v517 = vsel %vm257, %v516, %v515
        %v518 = vrot.slane %v507, 2
        %v519 = vsel %vm260, %v518, %v517
        %v520 = vrot.slane %v507, 1
        %v521 = vsel %vm263, %v520, %v519
        %v522 = vrot.slane %v507, 7
        %v523 = vsel %vm245, %v522, %v507
        %v524 = vrot.slane %v507, 6
        %v525 = vsel %vm248, %v524, %v523
        %v526 = vrot.slane %v507, 5
        %v527 = vsel %vm251, %v526, %v525
        %v528 = vsel %vm254, %v514, %v527
        %v529 = vsel %vm257, %v516, %v528
        %v530 = vsel %vm260, %v518, %v529
        %v531 = vsel %vm263, %v520, %v530
        %v532 = vpack.c.b16 %v521, %v521
        %v533 = vpack.c.b16 %v531, %v531
        %534 = vrot.lane.b32.xlu0 %v532, 114
        %v535 = vpop.permute.xlu0 %534
        %536 = vrot.lane.b32.xlu0 %v533, 114
        %v537 = vpop.permute.xlu0 %536
        %v538 = vrot.slane %v535, 4
        %v539 = vrot.slane %v537, 4
        %vm540 = vcmask 932864
        %v541 = vsel %vm540, %v538, %v535
        %v542 = vsel %vm540, %v539, %v537
        %vm545 = vcmask 1044368
        %vm546 = vcmask 15364
        %vm547 = vmor %vm546, %vm545
        %548 = vst.msk [vmem:[#allocation2 + $0x4] sm:$0xff] %vm547, %v541
        %549 = vst.msk [vmem:[#allocation2 + $0x14] sm:$0xff] %vm547, %v542
        %v550 = vrot.slane %v503, 1
        %v551 = vsel %vm245, %v504, %v550
        %v552 = vrot.slane %v505, 7
        %v553 = vsel %vm248, %v552, %v551
        %v554 = vrot.slane %v506, 6
        %v555 = vsel %vm251, %v554, %v553
        %v556 = vsel %vm254, %v526, %v555
        %v557 = vsel %vm257, %v514, %v556
        %v558 = vsel %vm260, %v516, %v557
        %v559 = vsel %vm263, %v518, %v558
        %v560 = vsel %vm245, %v507, %v520
        %v561 = vsel %vm248, %v522, %v560
        %v562 = vsel %vm251, %v524, %v561
        %v563 = vsel %vm254, %v526, %v562
        %v564 = vsel %vm257, %v514, %v563
        %v565 = vsel %vm260, %v516, %v564
        %v566 = vsel %vm263, %v518, %v565
        %v567 = vpack.c.b16 %v559, %v559
        %v568 = vpack.c.b16 %v566, %v566
        %569 = vrot.lane.b32.xlu0 %v567, 10
        %v570 = vpop.permute.xlu0 %569
        %571 = vrot.lane.b32.xlu0 %v568, 10
        %v572 = vpop.permute.xlu0 %571
        %vm575 = vcmask 207952
        %576 = vst.msk [vmem:[#allocation2 + $0x8] sm:$0xf] %vm575, %v570
        %577 = vst.msk [vmem:[#allocation2 + $0x18] sm:$0xf] %vm575, %v572
        %v578 = vrot.slane %v503, 2
        %v579 = vrot.slane %v504, 1
        %v580 = vsel %vm245, %v579, %v578
        %v581 = vsel %vm248, %v505, %v580
        %v582 = vrot.slane %v506, 7
        %v583 = vsel %vm251, %v582, %v581
        %v584 = vsel %vm254, %v524, %v583
        %v585 = vsel %vm257, %v526, %v584
        %v586 = vsel %vm260, %v514, %v585
        %v587 = vsel %vm263, %v516, %v586
        %v588 = vsel %vm245, %v520, %v518
        %v589 = vsel %vm248, %v507, %v588
        %v590 = vsel %vm251, %v522, %v589
        %v591 = vsel %vm254, %v524, %v590
        %v592 = vsel %vm257, %v526, %v591
        %v593 = vsel %vm260, %v514, %v592
        %v594 = vsel %vm263, %v516, %v593
        %v595 = vpack.c.b16 %v587, %v587
        %v596 = vpack.c.b16 %v594, %v594
        %597 = vrot.lane.b32.xlu0 %v595, 34
        %v598 = vpop.permute.xlu0 %597
        %599 = vrot.lane.b32.xlu0 %v596, 34
        %v600 = vpop.permute.xlu0 %599
        %vm603 = vcmask 404752
        %604 = vst.msk [vmem:[#allocation2 + $0x8] sm:$0xf] %vm603, %v598
        %605 = vst.msk [vmem:[#allocation2 + $0x18] sm:$0xf] %vm603, %v600
        %v606 = vrot.slane %v503, 3
        %v607 = vrot.slane %v504, 2
        %v608 = vsel %vm245, %v607, %v606
        %v609 = vrot.slane %v505, 1
        %v610 = vsel %vm248, %v609, %v608
        %v611 = vsel %vm251, %v506, %v610
        %v612 = vsel %vm254, %v522, %v611
        %v613 = vsel %vm257, %v524, %v612
        %v614 = vsel %vm260, %v526, %v613
        %v615 = vsel %vm263, %v514, %v614
        %v616 = vsel %vm245, %v518, %v516
        %v617 = vsel %vm248, %v520, %v616
        %v618 = vsel %vm251, %v507, %v617
        %v619 = vsel %vm254, %v522, %v618
        %v620 = vsel %vm257, %v524, %v619
        %v621 = vsel %vm260, %v526, %v620
        %v622 = vsel %vm263, %v514, %v621
        %v623 = vpack.c.b16 %v615, %v615
        %v624 = vpack.c.b16 %v622, %v622
        %625 = vrot.lane.b32.xlu0 %v623, 58
        %v626 = vpop.permute.xlu0 %625
        %627 = vrot.lane.b32.xlu0 %v624, 58
        %v628 = vpop.permute.xlu0 %627
        %vm631 = vcmask 601552
        %632 = vst.msk [vmem:[#allocation2 + $0x8] sm:$0xf] %vm631, %v626
        %633 = vst.msk [vmem:[#allocation2 + $0x18] sm:$0xf] %vm631, %v628
        %v634 = vrot.slane %v503, 4
        %v635 = vrot.slane %v504, 3
        %v636 = vsel %vm245, %v635, %v634
        %v637 = vrot.slane %v505, 2
        %v638 = vsel %vm248, %v637, %v636
        %v639 = vrot.slane %v506, 1
        %v640 = vsel %vm251, %v639, %v638
        %v641 = vsel %vm254, %v507, %v640
        %v642 = vsel %vm257, %v522, %v641
        %v643 = vsel %vm260, %v524, %v642
        %v644 = vsel %vm263, %v526, %v643
        %v645 = vsel %vm245, %v516, %v514
        %v646 = vsel %vm248, %v518, %v645
        %v647 = vsel %vm251, %v520, %v646
        %v648 = vsel %vm254, %v507, %v647
        %v649 = vsel %vm257, %v522, %v648
        %v650 = vsel %vm260, %v524, %v649
        %v651 = vsel %vm263, %v526, %v650
        %v652 = vpack.c.b16 %v644, %v644
        %v653 = vpack.c.b16 %v651, %v651
        %654 = vrot.lane.b32.xlu0 %v652, 82
        %v655 = vpop.permute.xlu0 %654
        %656 = vrot.lane.b32.xlu0 %v653, 82
        %v657 = vpop.permute.xlu0 %656
        %vm660 = vcmask 798352
        %661 = vst.msk [vmem:[#allocation2 + $0x8] sm:$0xf] %vm660, %v655
        %662 = vst.msk [vmem:[#allocation2 + $0x18] sm:$0xf] %vm660, %v657
        %v663 = vrot.slane %v503, 5
        %v664 = vrot.slane %v504, 4
        %v665 = vsel %vm245, %v664, %v663
        %v666 = vrot.slane %v505, 3
        %v667 = vsel %vm248, %v666, %v665
        %v668 = vrot.slane %v506, 2
        %v669 = vsel %vm251, %v668, %v667
        %v670 = vsel %vm254, %v520, %v669
        %v671 = vsel %vm257, %v507, %v670
        %v672 = vsel %vm260, %v522, %v671
        %v673 = vsel %vm263, %v524, %v672
        %v674 = vsel %vm245, %v514, %v526
        %v675 = vsel %vm248, %v516, %v674
        %v676 = vsel %vm251, %v518, %v675
        %v677 = vsel %vm254, %v520, %v676
        %v678 = vsel %vm257, %v507, %v677
        %v679 = vsel %vm260, %v522, %v678
        %v680 = vsel %vm263, %v524, %v679
        %v681 = vpack.c.b16 %v673, %v673
        %v682 = vpack.c.b16 %v680, %v680
        %683 = vrot.lane.b32.xlu0 %v681, 106
        %v684 = vpop.permute.xlu0 %683
        %685 = vrot.lane.b32.xlu0 %v682, 106
        %v686 = vpop.permute.xlu0 %685
        %vm689 = vcmask 995152
        %690 = vst.msk [vmem:[#allocation2 + $0x8] sm:$0xf] %vm689, %v684
        %691 = vst.msk [vmem:[#allocation2 + $0x18] sm:$0xf] %vm689, %v686
        %v692 = vrot.slane %v503, 6
        %v693 = vrot.slane %v504, 5
        %v694 = vsel %vm245, %v693, %v692
        %v695 = vrot.slane %v505, 4
        %v696 = vsel %vm248, %v695, %v694
        %v697 = vrot.slane %v506, 3
        %v698 = vsel %vm251, %v697, %v696
        %v699 = vsel %vm254, %v518, %v698
        %v700 = vsel %vm257, %v520, %v699
        %v701 = vsel %vm260, %v507, %v700
        %v702 = vsel %vm263, %v522, %v701
        %v703 = vsel %vm245, %v526, %v524
        %v704 = vsel %vm248, %v514, %v703
        %v705 = vsel %vm251, %v516, %v704
        %v706 = vsel %vm254, %v518, %v705
        %v707 = vsel %vm257, %v520, %v706
        %v708 = vsel %vm260, %v507, %v707
        %v709 = vsel %vm263, %v522, %v708
        %v710 = vpack.c.b16 %v702, %v702
        %v711 = vpack.c.b16 %v709, %v709
        %712 = vrot.lane.b32.xlu0 %v710, 2
        %v713 = vpop.permute.xlu0 %712
        %714 = vrot.lane.b32.xlu0 %v711, 2
        %v715 = vpop.permute.xlu0 %714
        %vm718 = vcmask 142352
        %719 = vst.msk [vmem:[#allocation2 + $0xc] sm:$0xf] %vm718, %v713
        %720 = vst.msk [vmem:[#allocation2 + $0x1c] sm:$0xf] %vm718, %v715
        %v721 = vrot.slane %v503, 7
        %v722 = vrot.slane %v504, 6
        %v723 = vsel %vm245, %v722, %v721
        %v724 = vrot.slane %v505, 5
        %v725 = vsel %vm248, %v724, %v723
        %v726 = vrot.slane %v506, 4
        %v727 = vsel %vm251, %v726, %v725
        %v728 = vsel %vm254, %v516, %v727
        %v729 = vsel %vm257, %v518, %v728
        %v730 = vsel %vm260, %v520, %v729
        %v731 = vsel %vm263, %v507, %v730
        %v732 = vsel %vm245, %v524, %v522
        %v733 = vsel %vm248, %v526, %v732
        %v734 = vsel %vm251, %v514, %v733
        %v735 = vsel %vm254, %v516, %v734
        %v736 = vsel %vm257, %v518, %v735
        %v737 = vsel %vm260, %v520, %v736
        %v738 = vsel %vm263, %v507, %v737
        %v739 = vpack.c.b16 %v731, %v731
        %v740 = vpack.c.b16 %v738, %v738
        %741 = vrot.lane.b32.xlu0 %v739, 26
        %v742 = vpop.permute.xlu0 %741
        %743 = vrot.lane.b32.xlu0 %v740, 26
        %v744 = vpop.permute.xlu0 %743
        %vm747 = vcmask 339152
        %748 = vst.msk [vmem:[#allocation2 + $0xc] sm:$0xf] %vm747, %v742
        %749 = vst.msk [vmem:[#allocation2 + $0x1c] sm:$0xf] %vm747, %v744
        %750 = vst [vmem:[#allocation3] sm:$0xff] 0.0
        %751 = vst [vmem:[#allocation3 + $0x8] sm:$0xff] 0.0
        %752 = vst [vmem:[#allocation3 + $0x10] sm:$0xff] 0.0
        %v753 = vld [vmem:[#allocation2] sm:$0xff]
        %v754 = vld [vmem:[#allocation2 + $0x8] sm:$0xff]
        %v755 = vld [vmem:[#allocation2 + $0x10] sm:$0xff]
        %v756 = vld [vmem:[#allocation2 + $0x18] sm:$0xff]
        %v761 = vunpack.c.l.b16 %v753
        %v762 = vunpack.c.h.b16 %v753
        %v763 = vunpack.c.l.b16 %v754
        %v764 = vunpack.c.l.b16 %v755
        %v765 = vunpack.c.h.b16 %v755
        %v766 = vunpack.c.l.b16 %v756
        %v767 = vpack.c.b16 %v764, %v761
        %v768 = vpack.c.b16 %v765, %v762
        %v769 = vpack.c.b16 %v766, %v763
        %v773 = vunpack.c.h.b16 %v754
        %v774 = vunpack.c.h.b16 %v756
        %v775 = vpack.c.b16 %v774, %v773
        %776 = vrot.lane.b32.xlu0 %v767, 127
        %v777 = vpop.permute.xlu0 %776
        %778 = vrot.lane.b32.xlu0 %v768, 127
        %v779 = vpop.permute.xlu0 %778
        %780 = vrot.lane.b32.xlu0 %v769, 127
        %v781 = vpop.permute.xlu0 %780
        %782 = vrot.lane.b32.xlu0 %v775, 127
        %v783 = vpop.permute.xlu0 %782
        %vm784 = vcmask 1039360
        %v785 = vsel %vm784, %v777, %v779
        %v786 = vsel %vm784, %v779, %v781
        %v787 = vsel %vm784, %v781, %v783
        %791 = vrot.lane.b32.xlu0 %v767, 126
        %v792 = vpop.permute.xlu0 %791
        %793 = vrot.lane.b32.xlu0 %v768, 126
        %v794 = vpop.permute.xlu0 %793
        %795 = vrot.lane.b32.xlu0 %v769, 126
        %v796 = vpop.permute.xlu0 %795
        %797 = vrot.lane.b32.xlu0 %v775, 126
        %v798 = vpop.permute.xlu0 %797
        %vm799 = vcmask 1031168
        %v800 = vsel %vm799, %v792, %v794
        %v801 = vsel %vm799, %v794, %v796
        %v802 = vsel %vm799, %v796, %v798
        %806 = vrot.lane.b32.xlu0 %v767, 125
        %v807 = vpop.permute.xlu0 %806
        %808 = vrot.lane.b32.xlu0 %v768, 125
        %v809 = vpop.permute.xlu0 %808
        %810 = vrot.lane.b32.xlu0 %v769, 125
        %v811 = vpop.permute.xlu0 %810
        %812 = vrot.lane.b32.xlu0 %v775, 125
        %v813 = vpop.permute.xlu0 %812
        %vm814 = vcmask 1022976
        %v815 = vsel %vm814, %v807, %v809
        %v816 = vsel %vm814, %v809, %v811
        %v817 = vsel %vm814, %v811, %v813
        %821 = vrot.lane.b32.xlu0 %v767, 124
        %v822 = vpop.permute.xlu0 %821
        %823 = vrot.lane.b32.xlu0 %v768, 124
        %v824 = vpop.permute.xlu0 %823
        %825 = vrot.lane.b32.xlu0 %v769, 124
        %v826 = vpop.permute.xlu0 %825
        %827 = vrot.lane.b32.xlu0 %v775, 124
        %v828 = vpop.permute.xlu0 %827
        %vm829 = vcmask 1014784
        %v830 = vsel %vm829, %v822, %v824
        %v831 = vsel %vm829, %v824, %v826
        %v832 = vsel %vm829, %v826, %v828
        %v836 = vld [vmem:[#allocation3] sm:$0xff]
        %v837 = vld [vmem:[#allocation3 + $0x8] sm:$0xff]
        %v838 = vld [vmem:[#allocation3 + $0x10] sm:$0xff]
        %v839 = vld [vmem:[#allocation4] sm:$0xf]
        %vm840 = vcmask 654336
        %v842 = vsel %vm840, %v839, 0
        %844 = vmatprep.subr.bf16.mxu0 0
        %845 = vmatpush1.bf16.msra.mxu0 0
        %846 = vmatprep.subr.bf16.mxu0 0
        %847 = vmatpush1.bf16.msra.mxu0 0
        %848 = vmatprep.subr.bf16.mxu0 0
        %849 = vmatpush1.bf16.msra.mxu0 0
        %850 = vmatprep.subr.bf16.mxu0 %v831
        %851 = vmatpush1.bf16.msra.mxu0 %v830
        %852 = vmatprep.subr.bf16.mxu0 %v816
        %853 = vmatpush1.bf16.msra.mxu0 %v815
        %854 = vmatprep.subr.bf16.mxu0 %v801
        %855 = vmatpush1.bf16.msra.mxu0 %v800
        %856 = vmatprep.subr.bf16.mxu0 %v786
        %857 = vmatpush1.bf16.msra.mxu0 %v785
        %858 = vmatprep.subr.bf16.mxu0 %v768
        %859 = vmatpush1.bf16.msra.mxu0 %v767
        %860 = vmatprep.subr.bf16.mxu0 0
        %861 = vmatpush2.bf16.msra.mxu0 0
        %862 = vmatprep.subr.bf16.mxu0 0
        %863 = vmatpush2.bf16.msra.mxu0 0
        %864 = vmatprep.subr.bf16.mxu0 0
        %865 = vmatpush2.bf16.msra.mxu0 0
        %866 = vmatprep.subr.bf16.mxu0 0
        %867 = vmatpush2.bf16.msra.mxu0 0
        %868 = vmatprep.subr.bf16.mxu0 0
        %869 = vmatpush2.bf16.msra.mxu0 0
        %870 = vmatprep.subr.bf16.mxu0 0
        %871 = vmatpush2.bf16.msra.mxu0 0
        %872 = vmatprep.subr.bf16.mxu0 0
        %873 = vmatpush2.bf16.msra.mxu0 0
        %874 = vmatprep.subr.bf16.mxu0 0
        %875 = vmatpush2.bf16.msra.mxu0 0
        %876 = vmatprep.mubr.bf16.mxu0 0
        %877 = vmatmul.mubr.bf16.gmra.mxu0 %v842
        %v878 = vpop.f32.mrf.mxu0
        %v879 = vadd.f32 0.0, %v878
        %v880 = vpop.f32.mrf.mxu0
        %v881 = vadd.f32 0.0, %v880
        %v882 = vpop.f32.mrf.mxu0
        %v883 = vpop.f32.mrf.mxu0
        %884 = vdwg.mxu0
        %885 = vmatprep.subr.bf16.mxu0 0
        %886 = vmatpush1.bf16.msra.mxu0 0
        %887 = vmatprep.subr.bf16.mxu0 0
        %888 = vmatpush1.bf16.msra.mxu0 0
        %889 = vmatprep.subr.bf16.mxu0 0
        %890 = vmatpush1.bf16.msra.mxu0 0
        %891 = vmatprep.subr.bf16.mxu0 0
        %892 = vmatpush1.bf16.msra.mxu0 %v832
        %893 = vmatprep.subr.bf16.mxu0 0
        %894 = vmatpush1.bf16.msra.mxu0 %v817
        %895 = vmatprep.subr.bf16.mxu0 0
        %896 = vmatpush1.bf16.msra.mxu0 %v802
        %897 = vmatprep.subr.bf16.mxu0 0
        %898 = vmatpush1.bf16.msra.mxu0 %v787
        %899 = vmatprep.subr.bf16.mxu0 0
        %900 = vmatpush1.bf16.msra.mxu0 %v769
        %901 = vmatprep.subr.bf16.mxu0 0
        %902 = vmatpush2.bf16.msra.mxu0 0
        %903 = vmatprep.subr.bf16.mxu0 0
        %904 = vmatpush2.bf16.msra.mxu0 0
        %905 = vmatprep.subr.bf16.mxu0 0
        %906 = vmatpush2.bf16.msra.mxu0 0
        %907 = vmatprep.subr.bf16.mxu0 0
        %908 = vmatpush2.bf16.msra.mxu0 0
        %909 = vmatprep.subr.bf16.mxu0 0
        %910 = vmatpush2.bf16.msra.mxu0 0
        %911 = vmatprep.subr.bf16.mxu0 0
        %912 = vmatpush2.bf16.msra.mxu0 0
        %913 = vmatprep.subr.bf16.mxu0 0
        %914 = vmatpush2.bf16.msra.mxu0 0
        %915 = vmatprep.subr.bf16.mxu0 0
        %916 = vmatpush2.bf16.msra.mxu0 0
        %917 = vmatprep.mubr.bf16.mxu0 0
        %918 = vmatmul.mubr.bf16.gmra.mxu0 %v842
        %v919 = vpop.f32.mrf.mxu0
        %v920 = vadd.f32 0.0, %v919
        %v921 = vpop.f32.mrf.mxu0
        %v922 = vpop.f32.mrf.mxu0
        %v923 = vpop.f32.mrf.mxu0
        %924 = vdwg.mxu0
        %v925 = vadd.f32 %v836, %v879
        %v926 = vadd.f32 %v837, %v881
        %v927 = vadd.f32 %v838, %v920
        %928 = vst [vmem:[#allocation3] sm:$0xff] %v925
        %929 = vst [vmem:[#allocation3 + $0x8] sm:$0xff] %v926
        %930 = vst [vmem:[#allocation3 + $0x10] sm:$0xff] %v927
        %v931 = vld [vmem:[#allocation3] sm:$0xff]
        %v932 = vld [vmem:[#allocation3 + $0x8] sm:$0xff]
        %v933 = vld [vmem:[#allocation3 + $0x10] sm:$0xff]
        %s934 = scalar_lea.vmem [#allocation4], 4
        %v935 = vld [vmem:[%s934] sm:$0xf]
        %936 = vrot.lane.b32.xlu0 %v767, 104
        %v937 = vpop.permute.xlu0 %936
        %938 = vrot.lane.b32.xlu0 %v768, 104
        %v939 = vpop.permute.xlu0 %938
        %940 = vrot.lane.b32.xlu0 %v769, 104
        %v941 = vpop.permute.xlu0 %940
        %942 = vrot.lane.b32.xlu0 %v775, 104
        %v943 = vpop.permute.xlu0 %942
        %944 = vrot.lane.b32.xlu0 %v785, 104
        %v945 = vpop.permute.xlu0 %944
        %946 = vrot.lane.b32.xlu0 %v786, 104
        %v947 = vpop.permute.xlu0 %946
        %948 = vrot.lane.b32.xlu0 %v787, 104
        %v949 = vpop.permute.xlu0 %948
        %950 = vrot.lane.b32.xlu0 %v783, 104
        %v951 = vpop.permute.xlu0 %950
        %952 = vrot.lane.b32.xlu0 %v800, 104
        %v953 = vpop.permute.xlu0 %952
        %954 = vrot.lane.b32.xlu0 %v801, 104
        %v955 = vpop.permute.xlu0 %954
        %956 = vrot.lane.b32.xlu0 %v802, 104
        %v957 = vpop.permute.xlu0 %956
        %958 = vrot.lane.b32.xlu0 %v798, 104
        %v959 = vpop.permute.xlu0 %958
        %960 = vrot.lane.b32.xlu0 %v815, 104
        %v961 = vpop.permute.xlu0 %960
        %962 = vrot.lane.b32.xlu0 %v816, 104
        %v963 = vpop.permute.xlu0 %962
        %964 = vrot.lane.b32.xlu0 %v817, 104
        %v965 = vpop.permute.xlu0 %964
        %966 = vrot.lane.b32.xlu0 %v813, 104
        %v967 = vpop.permute.xlu0 %966
        %968 = vrot.lane.b32.xlu0 %v830, 104
        %v969 = vpop.permute.xlu0 %968
        %970 = vrot.lane.b32.xlu0 %v831, 104
        %v971 = vpop.permute.xlu0 %970
        %972 = vrot.lane.b32.xlu0 %v832, 104
        %v973 = vpop.permute.xlu0 %972
        %974 = vrot.lane.b32.xlu0 %v828, 104
        %v975 = vpop.permute.xlu0 %974
        %vm976 = vcmask 850944
        %v977 = vsel %vm976, %v937, %v939
        %v978 = vsel %vm976, %v939, %v941
        %v979 = vsel %vm976, %v941, %v943
        %v980 = vsel %vm976, %v945, %v947
        %v981 = vsel %vm976, %v947, %v949
        %v982 = vsel %vm976, %v949, %v951
        %v983 = vsel %vm976, %v953, %v955
        %v984 = vsel %vm976, %v955, %v957
        %v985 = vsel %vm976, %v957, %v959
        %v986 = vsel %vm976, %v961, %v963
        %v987 = vsel %vm976, %v963, %v965
        %v988 = vsel %vm976, %v965, %v967
        %v989 = vsel %vm976, %v969, %v971
        %v990 = vsel %vm976, %v971, %v973
        %v991 = vsel %vm976, %v973, %v975
        %v1008 = vsel %vm840, %v935, 0
        %1010 = vmatprep.subr.bf16.mxu0 0
        %1011 = vmatpush1.bf16.msra.mxu0 0
        %1012 = vmatprep.subr.bf16.mxu0 0
        %1013 = vmatpush1.bf16.msra.mxu0 0
        %1014 = vmatprep.subr.bf16.mxu0 0
        %1015 = vmatpush1.bf16.msra.mxu0 0
        %1016 = vmatprep.subr.bf16.mxu0 %v990
        %1017 = vmatpush1.bf16.msra.mxu0 %v989
        %1018 = vmatprep.subr.bf16.mxu0 %v987
        %1019 = vmatpush1.bf16.msra.mxu0 %v986
        %1020 = vmatprep.subr.bf16.mxu0 %v984
        %1021 = vmatpush1.bf16.msra.mxu0 %v983
        %1022 = vmatprep.subr.bf16.mxu0 %v981
        %1023 = vmatpush1.bf16.msra.mxu0 %v980
        %1024 = vmatprep.subr.bf16.mxu0 %v978
        %1025 = vmatpush1.bf16.msra.mxu0 %v977
        %1026 = vmatprep.subr.bf16.mxu0 0
        %1027 = vmatpush2.bf16.msra.mxu0 0
        %1028 = vmatprep.subr.bf16.mxu0 0
        %1029 = vmatpush2.bf16.msra.mxu0 0
        %1030 = vmatprep.subr.bf16.mxu0 0
        %1031 = vmatpush2.bf16.msra.mxu0 0
        %1032 = vmatprep.subr.bf16.mxu0 0
        %1033 = vmatpush2.bf16.msra.mxu0 0
        %1034 = vmatprep.subr.bf16.mxu0 0
        %1035 = vmatpush2.bf16.msra.mxu0 0
        %1036 = vmatprep.subr.bf16.mxu0 0
        %1037 = vmatpush2.bf16.msra.mxu0 0
        %1038 = vmatprep.subr.bf16.mxu0 0
        %1039 = vmatpush2.bf16.msra.mxu0 0
        %1040 = vmatprep.subr.bf16.mxu0 0
        %1041 = vmatpush2.bf16.msra.mxu0 0
        %1042 = vmatprep.mubr.bf16.mxu0 0
        %1043 = vmatmul.mubr.bf16.gmra.mxu0 %v1008
        %v1044 = vpop.f32.mrf.mxu0
        %v1045 = vadd.f32 0.0, %v1044
        %v1046 = vpop.f32.mrf.mxu0
        %v1047 = vadd.f32 0.0, %v1046
        %v1048 = vpop.f32.mrf.mxu0
        %v1049 = vpop.f32.mrf.mxu0
        %1050 = vdwg.mxu0
        %1051 = vmatprep.subr.bf16.mxu0 0
        %1052 = vmatpush1.bf16.msra.mxu0 0
        %1053 = vmatprep.subr.bf16.mxu0 0
        %1054 = vmatpush1.bf16.msra.mxu0 0
        %1055 = vmatprep.subr.bf16.mxu0 0
        %1056 = vmatpush1.bf16.msra.mxu0 0
        %1057 = vmatprep.subr.bf16.mxu0 0
        %1058 = vmatpush1.bf16.msra.mxu0 %v991
        %1059 = vmatprep.subr.bf16.mxu0 0
        %1060 = vmatpush1.bf16.msra.mxu0 %v988
        %1061 = vmatprep.subr.bf16.mxu0 0
        %1062 = vmatpush1.bf16.msra.mxu0 %v985
        %1063 = vmatprep.subr.bf16.mxu0 0
        %1064 = vmatpush1.bf16.msra.mxu0 %v982
        %1065 = vmatprep.subr.bf16.mxu0 0
        %1066 = vmatpush1.bf16.msra.mxu0 %v979
        %1067 = vmatprep.subr.bf16.mxu0 0
        %1068 = vmatpush2.bf16.msra.mxu0 0
        %1069 = vmatprep.subr.bf16.mxu0 0
        %1070 = vmatpush2.bf16.msra.mxu0 0
        %1071 = vmatprep.subr.bf16.mxu0 0
        %1072 = vmatpush2.bf16.msra.mxu0 0
        %1073 = vmatprep.subr.bf16.mxu0 0
        %1074 = vmatpush2.bf16.msra.mxu0 0
        %1075 = vmatprep.subr.bf16.mxu0 0
        %1076 = vmatpush2.bf16.msra.mxu0 0
        %1077 = vmatprep.subr.bf16.mxu0 0
        %1078 = vmatpush2.bf16.msra.mxu0 0
        %1079 = vmatprep.subr.bf16.mxu0 0
        %1080 = vmatpush2.bf16.msra.mxu0 0
        %1081 = vmatprep.subr.bf16.mxu0 0
        %1082 = vmatpush2.bf16.msra.mxu0 0
        %1083 = vmatprep.mubr.bf16.mxu0 0
        %1084 = vmatmul.mubr.bf16.gmra.mxu0 %v1008
        %v1085 = vpop.f32.mrf.mxu0
        %v1086 = vadd.f32 0.0, %v1085
        %v1087 = vpop.f32.mrf.mxu0
        %v1088 = vpop.f32.mrf.mxu0
        %v1089 = vpop.f32.mrf.mxu0
        %1090 = vdwg.mxu0
        %v1091 = vadd.f32 %v931, %v1045
        %v1092 = vadd.f32 %v932, %v1047
        %v1093 = vadd.f32 %v933, %v1086
        %1094 = vst [vmem:[#allocation3] sm:$0xff] %v1091
        %1095 = vst [vmem:[#allocation3 + $0x8] sm:$0xff] %v1092
        %1096 = vst [vmem:[#allocation3 + $0x10] sm:$0xff] %v1093
        %v1097 = vld [vmem:[#allocation3] sm:$0xff]
        %v1098 = vld [vmem:[#allocation3 + $0x8] sm:$0xff]
        %v1099 = vld [vmem:[#allocation3 + $0x10] sm:$0xff]
        %s1100 = scalar_lea.vmem [#allocation4], 8
        %v1101 = vld [vmem:[%s1100] sm:$0xf]
        %1102 = vrot.lane.b32.xlu0 %v767, 80
        %v1103 = vpop.permute.xlu0 %1102
        %1104 = vrot.lane.b32.xlu0 %v768, 80
        %v1105 = vpop.permute.xlu0 %1104
        %1106 = vrot.lane.b32.xlu0 %v769, 80
        %v1107 = vpop.permute.xlu0 %1106
        %1108 = vrot.lane.b32.xlu0 %v775, 80
        %v1109 = vpop.permute.xlu0 %1108
        %1110 = vrot.lane.b32.xlu0 %v785, 80
        %v1111 = vpop.permute.xlu0 %1110
        %1112 = vrot.lane.b32.xlu0 %v786, 80
        %v1113 = vpop.permute.xlu0 %1112
        %1114 = vrot.lane.b32.xlu0 %v787, 80
        %v1115 = vpop.permute.xlu0 %1114
        %1116 = vrot.lane.b32.xlu0 %v783, 80
        %v1117 = vpop.permute.xlu0 %1116
        %1118 = vrot.lane.b32.xlu0 %v800, 80
        %v1119 = vpop.permute.xlu0 %1118
        %1120 = vrot.lane.b32.xlu0 %v801, 80
        %v1121 = vpop.permute.xlu0 %1120
        %1122 = vrot.lane.b32.xlu0 %v802, 80
        %v1123 = vpop.permute.xlu0 %1122
        %1124 = vrot.lane.b32.xlu0 %v798, 80
        %v1125 = vpop.permute.xlu0 %1124
        %1126 = vrot.lane.b32.xlu0 %v815, 80
        %v1127 = vpop.permute.xlu0 %1126
        %1128 = vrot.lane.b32.xlu0 %v816, 80
        %v1129 = vpop.permute.xlu0 %1128
        %1130 = vrot.lane.b32.xlu0 %v817, 80
        %v1131 = vpop.permute.xlu0 %1130
        %1132 = vrot.lane.b32.xlu0 %v813, 80
        %v1133 = vpop.permute.xlu0 %1132
        %1134 = vrot.lane.b32.xlu0 %v830, 80
        %v1135 = vpop.permute.xlu0 %1134
        %1136 = vrot.lane.b32.xlu0 %v831, 80
        %v1137 = vpop.permute.xlu0 %1136
        %1138 = vrot.lane.b32.xlu0 %v832, 80
        %v1139 = vpop.permute.xlu0 %1138
        %1140 = vrot.lane.b32.xlu0 %v828, 80
        %v1141 = vpop.permute.xlu0 %1140
        %vm1142 = vcmask 654336
        %v1143 = vsel %vm1142, %v1103, %v1105
        %v1144 = vsel %vm1142, %v1105, %v1107
        %v1145 = vsel %vm1142, %v1107, %v1109
        %v1146 = vsel %vm1142, %v1111, %v1113
        %v1147 = vsel %vm1142, %v1113, %v1115
        %v1148 = vsel %vm1142, %v1115, %v1117
        %v1149 = vsel %vm1142, %v1119, %v1121
        %v1150 = vsel %vm1142, %v1121, %v1123
        %v1151 = vsel %vm1142, %v1123, %v1125
        %v1152 = vsel %vm1142, %v1127, %v1129
        %v1153 = vsel %vm1142, %v1129, %v1131
        %v1154 = vsel %vm1142, %v1131, %v1133
        %v1155 = vsel %vm1142, %v1135, %v1137
        %v1156 = vsel %vm1142, %v1137, %v1139
        %v1157 = vsel %vm1142, %v1139, %v1141
        %v1174 = vsel %vm840, %v1101, 0
        %1176 = vmatprep.subr.bf16.mxu0 0
        %1177 = vmatpush1.bf16.msra.mxu0 0
        %1178 = vmatprep.subr.bf16.mxu0 0
        %1179 = vmatpush1.bf16.msra.mxu0 0
        %1180 = vmatprep.subr.bf16.mxu0 0
        %1181 = vmatpush1.bf16.msra.mxu0 0
        %1182 = vmatprep.subr.bf16.mxu0 %v1156
        %1183 = vmatpush1.bf16.msra.mxu0 %v1155
        %1184 = vmatprep.subr.bf16.mxu0 %v1153
        %1185 = vmatpush1.bf16.msra.mxu0 %v1152
        %1186 = vmatprep.subr.bf16.mxu0 %v1150
        %1187 = vmatpush1.bf16.msra.mxu0 %v1149
        %1188 = vmatprep.subr.bf16.mxu0 %v1147
        %1189 = vmatpush1.bf16.msra.mxu0 %v1146
        %1190 = vmatprep.subr.bf16.mxu0 %v1144
        %1191 = vmatpush1.bf16.msra.mxu0 %v1143
        %1192 = vmatprep.subr.bf16.mxu0 0
        %1193 = vmatpush2.bf16.msra.mxu0 0
        %1194 = vmatprep.subr.bf16.mxu0 0
        %1195 = vmatpush2.bf16.msra.mxu0 0
        %1196 = vmatprep.subr.bf16.mxu0 0
        %1197 = vmatpush2.bf16.msra.mxu0 0
        %1198 = vmatprep.subr.bf16.mxu0 0
        %1199 = vmatpush2.bf16.msra.mxu0 0
        %1200 = vmatprep.subr.bf16.mxu0 0
        %1201 = vmatpush2.bf16.msra.mxu0 0
        %1202 = vmatprep.subr.bf16.mxu0 0
        %1203 = vmatpush2.bf16.msra.mxu0 0
        %1204 = vmatprep.subr.bf16.mxu0 0
        %1205 = vmatpush2.bf16.msra.mxu0 0
        %1206 = vmatprep.subr.bf16.mxu0 0
        %1207 = vmatpush2.bf16.msra.mxu0 0
        %1208 = vmatprep.mubr.bf16.mxu0 0
        %1209 = vmatmul.mubr.bf16.gmra.mxu0 %v1174
        %v1210 = vpop.f32.mrf.mxu0
        %v1211 = vadd.f32 0.0, %v1210
        %v1212 = vpop.f32.mrf.mxu0
        %v1213 = vadd.f32 0.0, %v1212
        %v1214 = vpop.f32.mrf.mxu0
        %v1215 = vpop.f32.mrf.mxu0
        %1216 = vdwg.mxu0
        %1217 = vmatprep.subr.bf16.mxu0 0
        %1218 = vmatpush1.bf16.msra.mxu0 0
        %1219 = vmatprep.subr.bf16.mxu0 0
        %1220 = vmatpush1.bf16.msra.mxu0 0
        %1221 = vmatprep.subr.bf16.mxu0 0
        %1222 = vmatpush1.bf16.msra.mxu0 0
        %1223 = vmatprep.subr.bf16.mxu0 0
        %1224 = vmatpush1.bf16.msra.mxu0 %v1157
        %1225 = vmatprep.subr.bf16.mxu0 0
        %1226 = vmatpush1.bf16.msra.mxu0 %v1154
        %1227 = vmatprep.subr.bf16.mxu0 0
        %1228 = vmatpush1.bf16.msra.mxu0 %v1151
        %1229 = vmatprep.subr.bf16.mxu0 0
        %1230 = vmatpush1.bf16.msra.mxu0 %v1148
        %1231 = vmatprep.subr.bf16.mxu0 0
        %1232 = vmatpush1.bf16.msra.mxu0 %v1145
        %1233 = vmatprep.subr.bf16.mxu0 0
        %1234 = vmatpush2.bf16.msra.mxu0 0
        %1235 = vmatprep.subr.bf16.mxu0 0
        %1236 = vmatpush2.bf16.msra.mxu0 0
        %1237 = vmatprep.subr.bf16.mxu0 0
        %1238 = vmatpush2.bf16.msra.mxu0 0
        %1239 = vmatprep.subr.bf16.mxu0 0
        %1240 = vmatpush2.bf16.msra.mxu0 0
        %1241 = vmatprep.subr.bf16.mxu0 0
        %1242 = vmatpush2.bf16.msra.mxu0 0
        %1243 = vmatprep.subr.bf16.mxu0 0
        %1244 = vmatpush2.bf16.msra.mxu0 0
        %1245 = vmatprep.subr.bf16.mxu0 0
        %1246 = vmatpush2.bf16.msra.mxu0 0
        %1247 = vmatprep.subr.bf16.mxu0 0
        %1248 = vmatpush2.bf16.msra.mxu0 0
        %1249 = vmatprep.mubr.bf16.mxu0 0
        %1250 = vmatmul.mubr.bf16.gmra.mxu0 %v1174
        %v1251 = vpop.f32.mrf.mxu0
        %v1252 = vadd.f32 0.0, %v1251
        %v1253 = vpop.f32.mrf.mxu0
        %v1254 = vpop.f32.mrf.mxu0
        %v1255 = vpop.f32.mrf.mxu0
        %1256 = vdwg.mxu0
        %v1257 = vadd.f32 %v1097, %v1211
        %v1258 = vadd.f32 %v1098, %v1213
        %v1259 = vadd.f32 %v1099, %v1252
        %1260 = vst [vmem:[#allocation3] sm:$0xff] %v1257
        %1261 = vst [vmem:[#allocation3 + $0x8] sm:$0xff] %v1258
        %1262 = vst [vmem:[#allocation3 + $0x10] sm:$0xff] %v1259
        %v1263 = vld [vmem:[#allocation3] sm:$0xff]
        %v1264 = vld [vmem:[#allocation3 + $0x8] sm:$0xff]
        %v1265 = vld [vmem:[#allocation3 + $0x10] sm:$0xff]
        %s1266 = scalar_lea.vmem [#allocation4], 12
        %v1267 = vld [vmem:[%s1266] sm:$0xf]
        %1268 = vrot.lane.b32.xlu0 %v767, 56
        %v1269 = vpop.permute.xlu0 %1268
        %1270 = vrot.lane.b32.xlu0 %v768, 56
        %v1271 = vpop.permute.xlu0 %1270
        %1272 = vrot.lane.b32.xlu0 %v769, 56
        %v1273 = vpop.permute.xlu0 %1272
        %1274 = vrot.lane.b32.xlu0 %v775, 56
        %v1275 = vpop.permute.xlu0 %1274
        %1276 = vrot.lane.b32.xlu0 %v785, 56
        %v1277 = vpop.permute.xlu0 %1276
        %1278 = vrot.lane.b32.xlu0 %v786, 56
        %v1279 = vpop.permute.xlu0 %1278
        %1280 = vrot.lane.b32.xlu0 %v787, 56
        %v1281 = vpop.permute.xlu0 %1280
        %1282 = vrot.lane.b32.xlu0 %v783, 56
        %v1283 = vpop.permute.xlu0 %1282
        %1284 = vrot.lane.b32.xlu0 %v800, 56
        %v1285 = vpop.permute.xlu0 %1284
        %1286 = vrot.lane.b32.xlu0 %v801, 56
        %v1287 = vpop.permute.xlu0 %1286
        %1288 = vrot.lane.b32.xlu0 %v802, 56
        %v1289 = vpop.permute.xlu0 %1288
        %1290 = vrot.lane.b32.xlu0 %v798, 56
        %v1291 = vpop.permute.xlu0 %1290
        %1292 = vrot.lane.b32.xlu0 %v815, 56
        %v1293 = vpop.permute.xlu0 %1292
        %1294 = vrot.lane.b32.xlu0 %v816, 56
        %v1295 = vpop.permute.xlu0 %1294
        %1296 = vrot.lane.b32.xlu0 %v817, 56
        %v1297 = vpop.permute.xlu0 %1296
        %1298 = vrot.lane.b32.xlu0 %v813, 56
        %v1299 = vpop.permute.xlu0 %1298
        %1300 = vrot.lane.b32.xlu0 %v830, 56
        %v1301 = vpop.permute.xlu0 %1300
        %1302 = vrot.lane.b32.xlu0 %v831, 56
        %v1303 = vpop.permute.xlu0 %1302
        %1304 = vrot.lane.b32.xlu0 %v832, 56
        %v1305 = vpop.permute.xlu0 %1304
        %1306 = vrot.lane.b32.xlu0 %v828, 56
        %v1307 = vpop.permute.xlu0 %1306
        %vm1308 = vcmask 457728
        %v1309 = vsel %vm1308, %v1269, %v1271
        %v1310 = vsel %vm1308, %v1271, %v1273
        %v1311 = vsel %vm1308, %v1273, %v1275
        %v1312 = vsel %vm1308, %v1277, %v1279
        %v1313 = vsel %vm1308, %v1279, %v1281
        %v1314 = vsel %vm1308, %v1281, %v1283
        %v1315 = vsel %vm1308, %v1285, %v1287
        %v1316 = vsel %vm1308, %v1287, %v1289
        %v1317 = vsel %vm1308, %v1289, %v1291
        %v1318 = vsel %vm1308, %v1293, %v1295
        %v1319 = vsel %vm1308, %v1295, %v1297
        %v1320 = vsel %vm1308, %v1297, %v1299
        %v1321 = vsel %vm1308, %v1301, %v1303
        %v1322 = vsel %vm1308, %v1303, %v1305
        %v1323 = vsel %vm1308, %v1305, %v1307
        %v1340 = vsel %vm840, %v1267, 0
        %1342 = vmatprep.subr.bf16.mxu0 0
        %1343 = vmatpush1.bf16.msra.mxu0 0
        %1344 = vmatprep.subr.bf16.mxu0 0
        %1345 = vmatpush1.bf16.msra.mxu0 0
        %1346 = vmatprep.subr.bf16.mxu0 0
        %1347 = vmatpush1.bf16.msra.mxu0 0
        %1348 = vmatprep.subr.bf16.mxu0 %v1322
        %1349 = vmatpush1.bf16.msra.mxu0 %v1321
        %1350 = vmatprep.subr.bf16.mxu0 %v1319
        %1351 = vmatpush1.bf16.msra.mxu0 %v1318
        %1352 = vmatprep.subr.bf16.mxu0 %v1316
        %1353 = vmatpush1.bf16.msra.mxu0 %v1315
        %1354 = vmatprep.subr.bf16.mxu0 %v1313
        %1355 = vmatpush1.bf16.msra.mxu0 %v1312
        %1356 = vmatprep.subr.bf16.mxu0 %v1310
        %1357 = vmatpush1.bf16.msra.mxu0 %v1309
        %1358 = vmatprep.subr.bf16.mxu0 0
        %1359 = vmatpush2.bf16.msra.mxu0 0
        %1360 = vmatprep.subr.bf16.mxu0 0
        %1361 = vmatpush2.bf16.msra.mxu0 0
        %1362 = vmatprep.subr.bf16.mxu0 0
        %1363 = vmatpush2.bf16.msra.mxu0 0
        %1364 = vmatprep.subr.bf16.mxu0 0
        %1365 = vmatpush2.bf16.msra.mxu0 0
        %1366 = vmatprep.subr.bf16.mxu0 0
        %1367 = vmatpush2.bf16.msra.mxu0 0
        %1368 = vmatprep.subr.bf16.mxu0 0
        %1369 = vmatpush2.bf16.msra.mxu0 0
        %1370 = vmatprep.subr.bf16.mxu0 0
        %1371 = vmatpush2.bf16.msra.mxu0 0
        %1372 = vmatprep.subr.bf16.mxu0 0
        %1373 = vmatpush2.bf16.msra.mxu0 0
        %1374 = vmatprep.mubr.bf16.mxu0 0
        %1375 = vmatmul.mubr.bf16.gmra.mxu0 %v1340
        %v1376 = vpop.f32.mrf.mxu0
        %v1377 = vadd.f32 0.0, %v1376
        %v1378 = vpop.f32.mrf.mxu0
        %v1379 = vadd.f32 0.0, %v1378
        %v1380 = vpop.f32.mrf.mxu0
        %v1381 = vpop.f32.mrf.mxu0
        %1382 = vdwg.mxu0
        %1383 = vmatprep.subr.bf16.mxu0 0
        %1384 = vmatpush1.bf16.msra.mxu0 0
        %1385 = vmatprep.subr.bf16.mxu0 0
        %1386 = vmatpush1.bf16.msra.mxu0 0
        %1387 = vmatprep.subr.bf16.mxu0 0
        %1388 = vmatpush1.bf16.msra.mxu0 0
        %1389 = vmatprep.subr.bf16.mxu0 0
        %1390 = vmatpush1.bf16.msra.mxu0 %v1323
        %1391 = vmatprep.subr.bf16.mxu0 0
        %1392 = vmatpush1.bf16.msra.mxu0 %v1320
        %1393 = vmatprep.subr.bf16.mxu0 0
        %1394 = vmatpush1.bf16.msra.mxu0 %v1317
        %1395 = vmatprep.subr.bf16.mxu0 0
        %1396 = vmatpush1.bf16.msra.mxu0 %v1314
        %1397 = vmatprep.subr.bf16.mxu0 0
        %1398 = vmatpush1.bf16.msra.mxu0 %v1311
        %1399 = vmatprep.subr.bf16.mxu0 0
        %1400 = vmatpush2.bf16.msra.mxu0 0
        %1401 = vmatprep.subr.bf16.mxu0 0
        %1402 = vmatpush2.bf16.msra.mxu0 0
        %1403 = vmatprep.subr.bf16.mxu0 0
        %1404 = vmatpush2.bf16.msra.mxu0 0
        %1405 = vmatprep.subr.bf16.mxu0 0
        %1406 = vmatpush2.bf16.msra.mxu0 0
        %1407 = vmatprep.subr.bf16.mxu0 0
        %1408 = vmatpush2.bf16.msra.mxu0 0
        %1409 = vmatprep.subr.bf16.mxu0 0
        %1410 = vmatpush2.bf16.msra.mxu0 0
        %1411 = vmatprep.subr.bf16.mxu0 0
        %1412 = vmatpush2.bf16.msra.mxu0 0
        %1413 = vmatprep.subr.bf16.mxu0 0
        %1414 = vmatpush2.bf16.msra.mxu0 0
        %1415 = vmatprep.mubr.bf16.mxu0 0
        %1416 = vmatmul.mubr.bf16.gmra.mxu0 %v1340
        %v1417 = vpop.f32.mrf.mxu0
        %v1418 = vadd.f32 0.0, %v1417
        %v1419 = vpop.f32.mrf.mxu0
        %v1420 = vpop.f32.mrf.mxu0
        %v1421 = vpop.f32.mrf.mxu0
        %1422 = vdwg.mxu0
        %v1423 = vadd.f32 %v1263, %v1377
        %v1424 = vadd.f32 %v1264, %v1379
        %v1425 = vadd.f32 %v1265, %v1418
        %1426 = vst [vmem:[#allocation3] sm:$0xff] %v1423
        %1427 = vst [vmem:[#allocation3 + $0x8] sm:$0xff] %v1424
        %1428 = vst [vmem:[#allocation3 + $0x10] sm:$0xff] %v1425
        %v1429 = vld [vmem:[#allocation3] sm:$0xff]
        %v1430 = vld [vmem:[#allocation3 + $0x8] sm:$0xff]
        %v1431 = vld [vmem:[#allocation3 + $0x10] sm:$0xff]
        %s1432 = scalar_lea.vmem [#allocation4], 16
        %v1433 = vld [vmem:[%s1432] sm:$0xf]
        %1434 = vrot.lane.b32.xlu0 %v767, 32
        %v1435 = vpop.permute.xlu0 %1434
        %1436 = vrot.lane.b32.xlu0 %v768, 32
        %v1437 = vpop.permute.xlu0 %1436
        %1438 = vrot.lane.b32.xlu0 %v769, 32
        %v1439 = vpop.permute.xlu0 %1438
        %1440 = vrot.lane.b32.xlu0 %v775, 32
        %v1441 = vpop.permute.xlu0 %1440
        %1442 = vrot.lane.b32.xlu0 %v785, 32
        %v1443 = vpop.permute.xlu0 %1442
        %1444 = vrot.lane.b32.xlu0 %v786, 32
        %v1445 = vpop.permute.xlu0 %1444
        %1446 = vrot.lane.b32.xlu0 %v787, 32
        %v1447 = vpop.permute.xlu0 %1446
        %1448 = vrot.lane.b32.xlu0 %v783, 32
        %v1449 = vpop.permute.xlu0 %1448
        %1450 = vrot.lane.b32.xlu0 %v800, 32
        %v1451 = vpop.permute.xlu0 %1450
        %1452 = vrot.lane.b32.xlu0 %v801, 32
        %v1453 = vpop.permute.xlu0 %1452
        %1454 = vrot.lane.b32.xlu0 %v802, 32
        %v1455 = vpop.permute.xlu0 %1454
        %1456 = vrot.lane.b32.xlu0 %v798, 32
        %v1457 = vpop.permute.xlu0 %1456
        %1458 = vrot.lane.b32.xlu0 %v815, 32
        %v1459 = vpop.permute.xlu0 %1458
        %1460 = vrot.lane.b32.xlu0 %v816, 32
        %v1461 = vpop.permute.xlu0 %1460
        %1462 = vrot.lane.b32.xlu0 %v817, 32
        %v1463 = vpop.permute.xlu0 %1462
        %1464 = vrot.lane.b32.xlu0 %v813, 32
        %v1465 = vpop.permute.xlu0 %1464
        %1466 = vrot.lane.b32.xlu0 %v830, 32
        %v1467 = vpop.permute.xlu0 %1466
        %1468 = vrot.lane.b32.xlu0 %v831, 32
        %v1469 = vpop.permute.xlu0 %1468
        %1470 = vrot.lane.b32.xlu0 %v832, 32
        %v1471 = vpop.permute.xlu0 %1470
        %1472 = vrot.lane.b32.xlu0 %v828, 32
        %v1473 = vpop.permute.xlu0 %1472
        %vm1474 = vcmask 261120
        %v1475 = vsel %vm1474, %v1435, %v1437
        %v1476 = vsel %vm1474, %v1437, %v1439
        %v1477 = vsel %vm1474, %v1439, %v1441
        %v1478 = vsel %vm1474, %v1443, %v1445
        %v1479 = vsel %vm1474, %v1445, %v1447
        %v1480 = vsel %vm1474, %v1447, %v1449
        %v1481 = vsel %vm1474, %v1451, %v1453
        %v1482 = vsel %vm1474, %v1453, %v1455
        %v1483 = vsel %vm1474, %v1455, %v1457
        %v1484 = vsel %vm1474, %v1459, %v1461
        %v1485 = vsel %vm1474, %v1461, %v1463
        %v1486 = vsel %vm1474, %v1463, %v1465
        %v1487 = vsel %vm1474, %v1467, %v1469
        %v1488 = vsel %vm1474, %v1469, %v1471
        %v1489 = vsel %vm1474, %v1471, %v1473
        %v1506 = vsel %vm840, %v1433, 0
        %1508 = vmatprep.subr.bf16.mxu0 0
        %1509 = vmatpush1.bf16.msra.mxu0 0
        %1510 = vmatprep.subr.bf16.mxu0 0
        %1511 = vmatpush1.bf16.msra.mxu0 0
        %1512 = vmatprep.subr.bf16.mxu0 0
        %1513 = vmatpush1.bf16.msra.mxu0 0
        %1514 = vmatprep.subr.bf16.mxu0 %v1488
        %1515 = vmatpush1.bf16.msra.mxu0 %v1487
        %1516 = vmatprep.subr.bf16.mxu0 %v1485
        %1517 = vmatpush1.bf16.msra.mxu0 %v1484
        %1518 = vmatprep.subr.bf16.mxu0 %v1482
        %1519 = vmatpush1.bf16.msra.mxu0 %v1481
        %1520 = vmatprep.subr.bf16.mxu0 %v1479
        %1521 = vmatpush1.bf16.msra.mxu0 %v1478
        %1522 = vmatprep.subr.bf16.mxu0 %v1476
        %1523 = vmatpush1.bf16.msra.mxu0 %v1475
        %1524 = vmatprep.subr.bf16.mxu0 0
        %1525 = vmatpush2.bf16.msra.mxu0 0
        %1526 = vmatprep.subr.bf16.mxu0 0
        %1527 = vmatpush2.bf16.msra.mxu0 0
        %1528 = vmatprep.subr.bf16.mxu0 0
        %1529 = vmatpush2.bf16.msra.mxu0 0
        %1530 = vmatprep.subr.bf16.mxu0 0
        %1531 = vmatpush2.bf16.msra.mxu0 0
        %1532 = vmatprep.subr.bf16.mxu0 0
        %1533 = vmatpush2.bf16.msra.mxu0 0
        %1534 = vmatprep.subr.bf16.mxu0 0
        %1535 = vmatpush2.bf16.msra.mxu0 0
        %1536 = vmatprep.subr.bf16.mxu0 0
        %1537 = vmatpush2.bf16.msra.mxu0 0
        %1538 = vmatprep.subr.bf16.mxu0 0
        %1539 = vmatpush2.bf16.msra.mxu0 0
        %1540 = vmatprep.mubr.bf16.mxu0 0
        %1541 = vmatmul.mubr.bf16.gmra.mxu0 %v1506
        %v1542 = vpop.f32.mrf.mxu0
        %v1543 = vadd.f32 0.0, %v1542
        %v1544 = vpop.f32.mrf.mxu0
        %v1545 = vadd.f32 0.0, %v1544
        %v1546 = vpop.f32.mrf.mxu0
        %v1547 = vpop.f32.mrf.mxu0
        %1548 = vdwg.mxu0
        %1549 = vmatprep.subr.bf16.mxu0 0
        %1550 = vmatpush1.bf16.msra.mxu0 0
        %1551 = vmatprep.subr.bf16.mxu0 0
        %1552 = vmatpush1.bf16.msra.mxu0 0
        %1553 = vmatprep.subr.bf16.mxu0 0
        %1554 = vmatpush1.bf16.msra.mxu0 0
        %1555 = vmatprep.subr.bf16.mxu0 0
        %1556 = vmatpush1.bf16.msra.mxu0 %v1489
        %1557 = vmatprep.subr.bf16.mxu0 0
        %1558 = vmatpush1.bf16.msra.mxu0 %v1486
        %1559 = vmatprep.subr.bf16.mxu0 0
        %1560 = vmatpush1.bf16.msra.mxu0 %v1483
        %1561 = vmatprep.subr.bf16.mxu0 0
        %1562 = vmatpush1.bf16.msra.mxu0 %v1480
        %1563 = vmatprep.subr.bf16.mxu0 0
        %1564 = vmatpush1.bf16.msra.mxu0 %v1477
        %1565 = vmatprep.subr.bf16.mxu0 0
        %1566 = vmatpush2.bf16.msra.mxu0 0
        %1567 = vmatprep.subr.bf16.mxu0 0
        %1568 = vmatpush2.bf16.msra.mxu0 0
        %1569 = vmatprep.subr.bf16.mxu0 0
        %1570 = vmatpush2.bf16.msra.mxu0 0
        %1571 = vmatprep.subr.bf16.mxu0 0
        %1572 = vmatpush2.bf16.msra.mxu0 0
        %1573 = vmatprep.subr.bf16.mxu0 0
        %1574 = vmatpush2.bf16.msra.mxu0 0
        %1575 = vmatprep.subr.bf16.mxu0 0
        %1576 = vmatpush2.bf16.msra.mxu0 0
        %1577 = vmatprep.subr.bf16.mxu0 0
        %1578 = vmatpush2.bf16.msra.mxu0 0
        %1579 = vmatprep.subr.bf16.mxu0 0
        %1580 = vmatpush2.bf16.msra.mxu0 0
        %1581 = vmatprep.mubr.bf16.mxu0 0
        %1582 = vmatmul.mubr.bf16.gmra.mxu0 %v1506
        %v1583 = vpop.f32.mrf.mxu0
        %v1584 = vadd.f32 0.0, %v1583
        %v1585 = vpop.f32.mrf.mxu0
        %v1586 = vpop.f32.mrf.mxu0
        %v1587 = vpop.f32.mrf.mxu0
        %1588 = vdwg.mxu0
        %v1589 = vadd.f32 %v1429, %v1543
        %v1590 = vadd.f32 %v1430, %v1545
        %v1591 = vadd.f32 %v1431, %v1584
        %1592 = vst [vmem:[#allocation3] sm:$0xff] %v1589
        %1593 = vst [vmem:[#allocation3 + $0x8] sm:$0xff] %v1590
        %1594 = vst [vmem:[#allocation3 + $0x10] sm:$0xff] %v1591
        %v1595 = vld [vmem:[#allocation3] sm:$0xff]
        %v1596 = vld [vmem:[#allocation3 + $0x8] sm:$0xff]
        %v1597 = vld [vmem:[#allocation3 + $0x10] sm:$0xff]
        %v1598 = vld [vmem:[%s1] sm:$0xff]
        %1600 = vset.pattern.permute.xlu0 0
        %1601 = vperm.xlu0 %1600, %v1598
        %v1602 = vpop.permute.xlu0 %1601
        %v1604 = vadd.f32 %v1595, %v1602
        %v1605 = vadd.f32 %v1596, %v1602
        %v1606 = vadd.f32 %v1597, %v1602
        %1607 = vst [vmem:[%s203] sm:$0xff] %v1604
        %1608 = vst [vmem:[%s203 + $0x8] sm:$0xff] %v1605
        %1609 = vst [vmem:[%s203 + $0x10] sm:$0xff] %v1606
        %s1610 = sand.u32 %s97, 1
        %s1611 = scalar_lea.sflag [#allocation6], %s1610
        %s1612 = sand.u32 %s97, 1
        %s1613 = smul.addr %s1612, 24
        %s1614 = scalar_lea.vmem [#allocation9], %s1613
        // Predicated region
        $region41: #{tpu_custom_call.1} parent=31 // pred_check
          %p1615 = pneg %p107
        $region42: #{tpu_custom_call.1} parent=31 // pred_check_branch
          %1617 = sbr.rel (%p1615) target = $region44
        $region43: #{tpu_custom_call.1} parent=31 // pred_region
          %s1619 = ssub.s32 384, 384
          %1620 = vsyncadd %s1611, %s1619
          %s1621 = smul.addr %s21, 3
          %s1622 = smul.addr %s1621, 128
          %s1623 = scalar_lea.hbm %s3, %s1622
          %s1625 = sshll.u32 %s1614, 4
          %s1626 = int_to_ptr.vmem [resolvable:$true] %s1625
          %1628 = dma.vmem_to_hbm [thread:$0]  %s1626, 384, %s1623, %s1611
        $region44: #{tpu_custom_call.1} parent=31 // pred_fallthru
          _
      $region32: #{tpu_custom_call.1} parent=5 // pred_fallthru
        _
      %p1629 = scmp.le.s32.totalorder 2, %s16
      // Predicated region
      $region45: #{tpu_custom_call.1} parent=5 // pred_check
        %p1630 = pneg %p1629
      $region46: #{tpu_custom_call.1} parent=5 // pred_check_branch
        %1632 = sbr.rel (%p1630) target = $region48
      $region47: #{tpu_custom_call.1} parent=5 // pred_region
        %s1633 = ssub.s32 %s16, 2
        // Predicated region
        $region49: #{tpu_custom_call.1} parent=47 // pred_check
          %p1634 = pneg %p113
        $region50: #{tpu_custom_call.1} parent=47 // pred_check_branch
          %1636 = sbr.rel (%p1634) target = $region52
        $region51: #{tpu_custom_call.1} parent=47 // pred_region
          %s1637 = sand.u32 %s98, 1
          %s1638 = scalar_lea.sflag [#allocation6], %s1637
          %s1639 = sand.u32 %s98, 1
          %s1640 = smul.addr %s1639, 24
          %s1641 = scalar_lea.vmem [#allocation9], %s1640
          %1642 = dma.done %s1638, 384
        $region52: #{tpu_custom_call.1} parent=47 // pred_fallthru
          _
      $region48: #{tpu_custom_call.1} parent=5 // pred_fallthru
        _
    $region6: #{tpu_custom_call.1} parent=1 // loop_footer
      %s20 = sadd.s32 1, %s16
    $region7: #{tpu_custom_call.1} parent=1 // loop_footer_branch
      %15 = sbr.rel target = $region3
    $region8: #{tpu_custom_call.1} parent=1 // loop_exit
      _
    %1643 = vsyncpa [#allocation5], 1
    %s1644 = scalar_lea.sflag [#allocation5], 1
    %1645 = vsyncpa %s1644, 1
    %1646 = vsyncpa [#allocation8], 1
    %s1647 = scalar_lea.sflag [#allocation8], 1
    %1648 = vsyncpa %s1647, 1
    %1649 = vsyncpa [#allocation6], 1
    %s1650 = scalar_lea.sflag [#allocation6], 1
    %1651 = vsyncpa %s1650, 1

</llo_original>
